<compile_context>
chip_gen: v7x
topology: tpu7x:2x2x1
jax: 0.10.0
libtpu: 0.0.40
codegen_flags: <defaults>
</compile_context>

<pallas_src>
import jax
import jax.numpy as jnp
from jax.experimental import pallas as pl
from jax.experimental.pallas import tpu as pltpu


# ----------------------------------------------------------------------------
# Fused kernel: ReLU + batched input projection + LSTM recurrence + batched FC
# ----------------------------------------------------------------------------
def _relu_lstm_fc_kernel(x_ref, wih_ref, whh_ref, b_ref, h0_ref, c0_ref,
                         fcw_ref, fcb_ref,
                         y_ref, hn_ref, cn_ref,
                         xw_scr, hh_scr):
    LB, _ = x_ref.shape
    B, H = h0_ref.shape              # B is the sublane-padded batch (multiple of 8)
    L = LB // B

    # ReLU + fused input projection for ALL timesteps at once (off the serial
    # chain): (L*B, Din)bf16 @ (Din, 4H)bf16 -> f32, + bias.  Staged in VMEM.
    xr = jnp.maximum(x_ref[...], 0.0).astype(jnp.bfloat16)
    xw_scr[...] = (jnp.dot(xr, wih_ref[...], preferred_element_type=jnp.float32)
                   + b_ref[...])                                    # (L*B, 4H) f32

    whh = whh_ref[...]                                              # (H, 4H) bf16, hoisted
    h = h0_ref[...]                                                 # (B, H) f32
    c = c0_ref[...]                                                 # (B, H) f32

    # Fully unrolled recurrence.  The 0.5 sigmoid pre-scale is already folded into
    # the i/f/o columns of wih/whh/b (wrapper), so one unscaled tanh pass covers
    # all four gates:  sigmoid(z) = 0.5*(tanh(z/2)+1),  g-gate gets tanh(z).
    for t in range(L):
        pre = (xw_scr[pl.ds(t * B, B), :]
               + jnp.dot(h.astype(jnp.bfloat16), whh,
                         preferred_element_type=jnp.float32))       # (B, 4H) f32
        tt = jnp.tanh(pre)
        i_g = 0.5 * (tt[:, 0 * H:1 * H] + 1.0)
        f_g = 0.5 * (tt[:, 1 * H:2 * H] + 1.0)
        g_g = tt[:, 2 * H:3 * H]
        o_g = 0.5 * (tt[:, 3 * H:4 * H] + 1.0)
        c = f_g * c + i_g * g_g
        h = o_g * jnp.tanh(c)
        hh_scr[pl.ds(t * B, B), :] = h                              # sublane-aligned store

    hn_ref[...] = h
    cn_ref[...] = c

    # Per-timestep FC hoisted out of the loop: one bf16 matmul + one lane-dense
    # (padded-Dout) bulk store.
    hh = hh_scr[...].astype(jnp.bfloat16)                           # (L*B, H)
    y_ref[...] = (jnp.dot(hh, fcw_ref[...], preferred_element_type=jnp.float32)
                  + fcb_ref[...]).astype(y_ref.dtype)


def _full_spec(a):
    nd = a.ndim
    return pl.BlockSpec(a.shape, lambda *i, _nd=nd: (0,) * _nd)


def relu_lstm_fc(x_tm, wih, whh, b, h0, c0, fcw, fcb):
    """x_tm: (L*Bp, Din) time-major flattened input, rows ordered (t, b), Bp % 8 == 0."""
    LB, _ = x_tm.shape
    B, H = h0.shape
    G = 4 * H
    Dp = fcw.shape[1]
    args = (x_tm, wih, whh, b, h0, c0, fcw, fcb)
    return pl.pallas_call(
        _relu_lstm_fc_kernel,
        grid=(1,),
        in_specs=[_full_spec(a) for a in args],
        out_specs=(pl.BlockSpec((LB, Dp), lambda i: (0, 0)),
                   pl.BlockSpec((B, H), lambda i: (0, 0)),
                   pl.BlockSpec((B, H), lambda i: (0, 0))),
        out_shape=(jax.ShapeDtypeStruct((LB, Dp), jnp.float32),
                   jax.ShapeDtypeStruct((B, H), jnp.float32),
                   jax.ShapeDtypeStruct((B, H), jnp.float32)),
        scratch_shapes=[pltpu.VMEM((LB, G), jnp.float32),    # staged input projection
                        pltpu.VMEM((LB, H), jnp.float32)],   # h_t history
        compiler_params=pltpu.CompilerParams(dimension_semantics=("arbitrary",)),
    )(*args)


# ----------------------------------------------------------------------------
# Module forward (Pallas path).  x: (B, input_dim, L); h_s = (h0, c0), each (1, B, H).
# Returns (out, (h_n, c_n)) with out: (B, output_dim, L), matching the PyTorch module.
# ----------------------------------------------------------------------------
def lstm_model_forward(params, x, h_s):
    B, Din, L = x.shape
    h0, c0 = h_s
    H = params["whh"].shape[0]
    Dout = params["fcw"].shape[1]
    G = 4 * H

    # --- host-side parameter prep (perf feedback) ---------------------------
    # Fold the 0.5 sigmoid pre-scale into the i/f/o gate columns (g columns keep
    # scale 1.0), then cast matmul weights to bf16 (exact scaling by 0.5).
    col = jnp.arange(G)
    gate_scale = jnp.where((col >= 2 * H) & (col < 3 * H), 1.0, 0.5).astype(jnp.float32)
    wih = (params["wih"] * gate_scale).astype(jnp.bfloat16)         # (Din, 4H)
    whh = (params["whh"] * gate_scale).astype(jnp.bfloat16)         # (H, 4H)
    b = (params["b"] * gate_scale).astype(jnp.float32)              # (1, 4H), stays f32

    # Lane-dense FC output: pad Dout up to a multiple of 128 with zero columns.
    Dp = max(128, ((Dout + 127) // 128) * 128)
    fcw = jnp.zeros((H, Dp), jnp.bfloat16).at[:, :Dout].set(
        params["fcw"].astype(jnp.bfloat16))
    fcb = jnp.zeros((1, Dp), jnp.float32).at[0, :Dout].set(params["fcb"])

    # Sublane-aligned batch: pad B up to a multiple of 8 with zero rows.
    Bp = ((B + 7) // 8) * 8
    x_tm = jnp.transpose(x, (2, 0, 1))                               # (L, B, Din)
    x_tm = jnp.pad(x_tm, ((0, 0), (0, Bp - B), (0, 0))).reshape(L * Bp, Din)
    h0p = jnp.pad(h0[0], ((0, Bp - B), (0, 0)))
    c0p = jnp.pad(c0[0], ((0, Bp - B), (0, 0)))

    y2d, hn, cn = relu_lstm_fc(x_tm, wih, whh, b, h0p, c0p, fcw, fcb)

    y = y2d.reshape(L, Bp, Dp)[:, :B, :Dout]                         # drop padding
    out = jnp.transpose(y, (1, 2, 0))                                # (B, Dout, L)
    return out, (hn[:B][None], cn[:B][None])


# ----------------------------------------------------------------------------
# Pure-JAX reference (PyTorch semantics) for validation.
# Param layout: wih = W_ih.T (Din,4H), whh = W_hh.T (H,4H), b = (b_ih + b_hh) (1,4H),
# gate order i, f, g, o (PyTorch); fcw = fc.weight.T, fcb = fc.bias.
# ----------------------------------------------------------------------------
def reference_forward(params, x, h_s):
    B, Din, L = x.shape
    H = params["whh"].shape[0]
    xr = jnp.maximum(x, 0.0)
    xs = jnp.transpose(xr, (0, 2, 1))                                # (B, L, Din)

    h = h_s[0][0]
    c = h_s[1][0]
    wih, whh, b = params["wih"], params["whh"], params["b"]
    ys = []
    for t in range(L):
        z = xs[:, t, :] @ wih + h @ whh + b                          # (B, 4H)
        i = jax.nn.sigmoid(z[:, 0 * H:1 * H])
        f = jax.nn.sigmoid(z[:, 1 * H:2 * H])
        g = jnp.tanh(z[:, 2 * H:3 * H])
        o = jax.nn.sigmoid(z[:, 3 * H:4 * H])
        c = f * c + i * g
        h = o * jnp.tanh(c)
        ys.append(h @ params["fcw"] + params["fcb"])
    y = jnp.transpose(jnp.stack(ys, axis=1), (0, 2, 1))              # (B, Dout, L)
    return y, (h[None], c[None])


if __name__ == "__main__":
    # Small shapes consistent with the module: LSTMModel(input_dim=4, hidden=32, output=8)
    B, Din, H, Dout, L = 2, 4, 32, 8, 16

    key = jax.random.PRNGKey(0)
    ks = jax.random.split(key, 8)
    params = {
        "wih": 0.2 * jax.random.normal(ks[0], (Din, 4 * H), jnp.float32),  # = W_ih_l0.T
        "whh": 0.2 * jax.random.normal(ks[1], (H, 4 * H), jnp.float32),    # = W_hh_l0.T
        "b":   0.1 * jax.random.normal(ks[2], (1, 4 * H), jnp.float32),    # = b_ih + b_hh
        "fcw": 0.2 * jax.random.normal(ks[3], (H, Dout), jnp.float32),     # = fc.weight.T
        "fcb": 0.1 * jax.random.normal(ks[4], (Dout,), jnp.float32),
    }
    x = jax.random.normal(ks[5], (B, Din, L), jnp.float32)
    h0 = 0.1 * jax.random.normal(ks[6], (1, B, H), jnp.float32)
    c0 = 0.1 * jax.random.normal(ks[7], (1, B, H), jnp.float32)

    fwd = jax.jit(lstm_model_forward)
    out, (hn, cn) = fwd(params, x, (h0, c0))
    jax.block_until_ready(out)

    with jax.default_matmul_precision("highest"):
        ref_out, (ref_hn, ref_cn) = reference_forward(params, x, (h0, c0))

    # bf16 MXU operands over a 16-step recurrence: 2e-2 tolerance (f32 accumulation,
    # saturating gates keep the compounded error well below this).
    assert out.shape == (B, Dout, L)
    assert hn.shape == (1, B, H) and cn.shape == (1, B, H)
    assert jnp.allclose(out, ref_out, rtol=2e-2, atol=2e-2), "output mismatch"
    assert jnp.allclose(hn, ref_hn, rtol=2e-2, atol=2e-2), "h_n mismatch"
    assert jnp.allclose(cn, ref_cn, rtol=2e-2, atol=2e-2), "c_n mismatch"

    print("KERNEL_OK")
</pallas_src>

<mosaic_0001>
module attributes {stable_mosaic.version = 11 : i64} {
  func.func @_relu_lstm_fc_kernel(%arg0: i32, %arg1: memref<128x4xf32, #tpu.memory_space<vmem>>, %arg2: memref<4x128xbf16, #tpu.memory_space<vmem>>, %arg3: memref<32x128xbf16, #tpu.memory_space<vmem>>, %arg4: memref<1x128xf32, #tpu.memory_space<vmem>>, %arg5: memref<8x32xf32, #tpu.memory_space<vmem>>, %arg6: memref<8x32xf32, #tpu.memory_space<vmem>>, %arg7: memref<32x128xbf16, #tpu.memory_space<vmem>>, %arg8: memref<1x128xf32, #tpu.memory_space<vmem>>, %arg9: memref<128x128xf32, #tpu.memory_space<vmem>>, %arg10: memref<8x32xf32, #tpu.memory_space<vmem>>, %arg11: memref<8x32xf32, #tpu.memory_space<vmem>>, %arg12: memref<128x128xf32, #tpu.memory_space<vmem>>, %arg13: memref<128x32xf32, #tpu.memory_space<vmem>>) attributes {dimension_semantics = [#tpu.dimension_semantics<arbitrary>], iteration_bounds = array<i64: 1>, scalar_prefetch = 0 : i64, scratch_operands = 2 : i64, tpu.core_type = #tpu.core_type<tc>, window_params = [{pipeline_mode = #tpu.pipeline_mode<synchronous>, transform_indices = @transform_0, window_bounds = array<i64: 128, 4>}, {pipeline_mode = #tpu.pipeline_mode<synchronous>, transform_indices = @transform_1, window_bounds = array<i64: 4, 128>}, {pipeline_mode = #tpu.pipeline_mode<synchronous>, transform_indices = @transform_2, window_bounds = array<i64: 32, 128>}, {pipeline_mode = #tpu.pipeline_mode<synchronous>, transform_indices = @transform_3, window_bounds = array<i64: 1, 128>}, {pipeline_mode = #tpu.pipeline_mode<synchronous>, transform_indices = @transform_4, window_bounds = array<i64: 8, 32>}, {pipeline_mode = #tpu.pipeline_mode<synchronous>, transform_indices = @transform_5, window_bounds = array<i64: 8, 32>}, {pipeline_mode = #tpu.pipeline_mode<synchronous>, transform_indices = @transform_6, window_bounds = array<i64: 32, 128>}, {pipeline_mode = #tpu.pipeline_mode<synchronous>, transform_indices = @transform_7, window_bounds = array<i64: 1, 128>}, {pipeline_mode = #tpu.pipeline_mode<synchronous>, transform_indices = @transform_8, window_bounds = array<i64: 128, 128>}, {pipeline_mode = #tpu.pipeline_mode<synchronous>, transform_indices = @transform_9, window_bounds = array<i64: 8, 32>}, {pipeline_mode = #tpu.pipeline_mode<synchronous>, transform_indices = @transform_10, window_bounds = array<i64: 8, 32>}]} {
    %c0 = arith.constant 0 : index
    %c0_0 = arith.constant 0 : index
    %0 = vector.load %arg1[%c0, %c0_0] : memref<128x4xf32, #tpu.memory_space<vmem>>, vector<128x4xf32>
    %cst = arith.constant 0.000000e+00 : f32
    %1 = vector.broadcast %cst : f32 to vector<128x4xf32>
    %2 = arith.maximumf %0, %1 : vector<128x4xf32>
    %3 = arith.truncf %2 : vector<128x4xf32> to vector<128x4xbf16>
    %c0_1 = arith.constant 0 : index
    %c0_2 = arith.constant 0 : index
    %4 = vector.load %arg2[%c0_1, %c0_2] : memref<4x128xbf16, #tpu.memory_space<vmem>>, vector<4x128xbf16>
    %cst_3 = arith.constant dense<0.000000e+00> : vector<128x128xf32>
    %5 = tpu.matmul %3, %4, %cst_3 {dimension_numbers = #tpu.dot_dimension_numbers<[1], [0], [0], [1], [0, 0, 1, 1], [], []>} : vector<128x4xbf16>, vector<4x128xbf16>, vector<128x128xf32> -> vector<128x128xf32>
    %c0_4 = arith.constant 0 : index
    %c0_5 = arith.constant 0 : index
    %6 = vector.load %arg4[%c0_4, %c0_5] : memref<1x128xf32, #tpu.memory_space<vmem>>, vector<1x128xf32>
    %7 = vector.broadcast %6 : vector<1x128xf32> to vector<128x128xf32>
    %8 = arith.addf %5, %7 : vector<128x128xf32>
    %c0_6 = arith.constant 0 : index
    %c0_7 = arith.constant 0 : index
    %9 = vector.load %arg12[%c0_6, %c0_7] : memref<128x128xf32, #tpu.memory_space<vmem>>, vector<128x128xf32>
    tpu.vector_store %arg12[%c0_6, %c0_7], %8 {strides = array<i32>} : memref<128x128xf32, #tpu.memory_space<vmem>>, vector<128x128xf32>,
    %c0_8 = arith.constant 0 : index
    %c0_9 = arith.constant 0 : index
    %10 = vector.load %arg3[%c0_8, %c0_9] : memref<32x128xbf16, #tpu.memory_space<vmem>>, vector<32x128xbf16>
    %c0_10 = arith.constant 0 : index
    %c0_11 = arith.constant 0 : index
    %11 = vector.load %arg5[%c0_10, %c0_11] : memref<8x32xf32, #tpu.memory_space<vmem>>, vector<8x32xf32>
    %c0_12 = arith.constant 0 : index
    %c0_13 = arith.constant 0 : index
    %12 = vector.load %arg6[%c0_12, %c0_13] : memref<8x32xf32, #tpu.memory_space<vmem>>, vector<8x32xf32>
    %c0_14 = arith.constant 0 : index
    %c0_15 = arith.constant 0 : index
    %13 = vector.load %arg12[%c0_14, %c0_15] : memref<128x128xf32, #tpu.memory_space<vmem>>, vector<8x128xf32>
    %14 = arith.truncf %11 : vector<8x32xf32> to vector<8x32xbf16>
    %cst_16 = arith.constant dense<0.000000e+00> : vector<8x128xf32>
    %15 = tpu.matmul %14, %10, %cst_16 {dimension_numbers = #tpu.dot_dimension_numbers<[1], [0], [0], [1], [0, 0, 1, 1], [], []>} : vector<8x32xbf16>, vector<32x128xbf16>, vector<8x128xf32> -> vector<8x128xf32>
    %16 = arith.addf %13, %15 : vector<8x128xf32>
    %17 = math.tanh %16 : vector<8x128xf32>
    %18 = vector.extract_strided_slice %17 {offsets = [0, 0], sizes = [8, 32], strides = [1, 1]} : vector<8x128xf32> to vector<8x32xf32>
    %cst_17 = arith.constant 1.000000e+00 : f32
    %19 = vector.broadcast %cst_17 : f32 to vector<8x32xf32>
    %20 = arith.addf %18, %19 : vector<8x32xf32>
    %cst_18 = arith.constant 5.000000e-01 : f32
    %21 = vector.broadcast %cst_18 : f32 to vector<8x32xf32>
    %22 = arith.mulf %21, %20 : vector<8x32xf32>
    %23 = vector.extract_strided_slice %17 {offsets = [0, 32], sizes = [8, 32], strides = [1, 1]} : vector<8x128xf32> to vector<8x32xf32>
    %cst_19 = arith.constant 1.000000e+00 : f32
    %24 = vector.broadcast %cst_19 : f32 to vector<8x32xf32>
    %25 = arith.addf %23, %24 : vector<8x32xf32>
    %cst_20 = arith.constant 5.000000e-01 : f32
    %26 = vector.broadcast %cst_20 : f32 to vector<8x32xf32>
    %27 = arith.mulf %26, %25 : vector<8x32xf32>
    %28 = vector.extract_strided_slice %17 {offsets = [0, 64], sizes = [8, 32], strides = [1, 1]} : vector<8x128xf32> to vector<8x32xf32>
    %29 = vector.extract_strided_slice %17 {offsets = [0, 96], sizes = [8, 32], strides = [1, 1]} : vector<8x128xf32> to vector<8x32xf32>
    %cst_21 = arith.constant 1.000000e+00 : f32
    %30 = vector.broadcast %cst_21 : f32 to vector<8x32xf32>
    %31 = arith.addf %29, %30 : vector<8x32xf32>
    %cst_22 = arith.constant 5.000000e-01 : f32
    %32 = vector.broadcast %cst_22 : f32 to vector<8x32xf32>
    %33 = arith.mulf %32, %31 : vector<8x32xf32>
    %34 = arith.mulf %27, %12 : vector<8x32xf32>
    %35 = arith.mulf %22, %28 : vector<8x32xf32>
    %36 = arith.addf %34, %35 : vector<8x32xf32>
    %37 = math.tanh %36 : vector<8x32xf32>
    %38 = arith.mulf %33, %37 : vector<8x32xf32>
    %c0_23 = arith.constant 0 : index
    %c0_24 = arith.constant 0 : index
    %39 = vector.load %arg13[%c0_23, %c0_24] : memref<128x32xf32, #tpu.memory_space<vmem>>, vector<8x32xf32>
    tpu.vector_store %arg13[%c0_23, %c0_24], %38 {strides = array<i32>} : memref<128x32xf32, #tpu.memory_space<vmem>>, vector<8x32xf32>,
    %c8 = arith.constant 8 : index
    %c0_25 = arith.constant 0 : index
    %40 = vector.load %arg12[%c8, %c0_25] : memref<128x128xf32, #tpu.memory_space<vmem>>, vector<8x128xf32>
    %41 = arith.truncf %38 : vector<8x32xf32> to vector<8x32xbf16>
    %cst_26 = arith.constant dense<0.000000e+00> : vector<8x128xf32>
    %42 = tpu.matmul %41, %10, %cst_26 {dimension_numbers = #tpu.dot_dimension_numbers<[1], [0], [0], [1], [0, 0, 1, 1], [], []>} : vector<8x32xbf16>, vector<32x128xbf16>, vector<8x128xf32> -> vector<8x128xf32>
    %43 = arith.addf %40, %42 : vector<8x128xf32>
    %44 = math.tanh %43 : vector<8x128xf32>
    %45 = vector.extract_strided_slice %44 {offsets = [0, 0], sizes = [8, 32], strides = [1, 1]} : vector<8x128xf32> to vector<8x32xf32>
    %cst_27 = arith.constant 1.000000e+00 : f32
    %46 = vector.broadcast %cst_27 : f32 to vector<8x32xf32>
    %47 = arith.addf %45, %46 : vector<8x32xf32>
    %cst_28 = arith.constant 5.000000e-01 : f32
    %48 = vector.broadcast %cst_28 : f32 to vector<8x32xf32>
    %49 = arith.mulf %48, %47 : vector<8x32xf32>
    %50 = vector.extract_strided_slice %44 {offsets = [0, 32], sizes = [8, 32], strides = [1, 1]} : vector<8x128xf32> to vector<8x32xf32>
    %cst_29 = arith.constant 1.000000e+00 : f32
    %51 = vector.broadcast %cst_29 : f32 to vector<8x32xf32>
    %52 = arith.addf %50, %51 : vector<8x32xf32>
    %cst_30 = arith.constant 5.000000e-01 : f32
    %53 = vector.broadcast %cst_30 : f32 to vector<8x32xf32>
    %54 = arith.mulf %53, %52 : vector<8x32xf32>
    %55 = vector.extract_strided_slice %44 {offsets = [0, 64], sizes = [8, 32], strides = [1, 1]} : vector<8x128xf32> to vector<8x32xf32>
    %56 = vector.extract_strided_slice %44 {offsets = [0, 96], sizes = [8, 32], strides = [1, 1]} : vector<8x128xf32> to vector<8x32xf32>
    %cst_31 = arith.constant 1.000000e+00 : f32
    %57 = vector.broadcast %cst_31 : f32 to vector<8x32xf32>
    %58 = arith.addf %56, %57 : vector<8x32xf32>
    %cst_32 = arith.constant 5.000000e-01 : f32
    %59 = vector.broadcast %cst_32 : f32 to vector<8x32xf32>
    %60 = arith.mulf %59, %58 : vector<8x32xf32>
    %61 = arith.mulf %54, %36 : vector<8x32xf32>
    %62 = arith.mulf %49, %55 : vector<8x32xf32>
    %63 = arith.addf %61, %62 : vector<8x32xf32>
    %64 = math.tanh %63 : vector<8x32xf32>
    %65 = arith.mulf %60, %64 : vector<8x32xf32>
    %c8_33 = arith.constant 8 : index
    %c0_34 = arith.constant 0 : index
    %66 = vector.load %arg13[%c8_33, %c0_34] : memref<128x32xf32, #tpu.memory_space<vmem>>, vector<8x32xf32>
    tpu.vector_store %arg13[%c8_33, %c0_34], %65 {strides = array<i32>} : memref<128x32xf32, #tpu.memory_space<vmem>>, vector<8x32xf32>,
    %c16 = arith.constant 16 : index
    %c0_35 = arith.constant 0 : index
    %67 = vector.load %arg12[%c16, %c0_35] : memref<128x128xf32, #tpu.memory_space<vmem>>, vector<8x128xf32>
    %68 = arith.truncf %65 : vector<8x32xf32> to vector<8x32xbf16>
    %cst_36 = arith.constant dense<0.000000e+00> : vector<8x128xf32>
    %69 = tpu.matmul %68, %10, %cst_36 {dimension_numbers = #tpu.dot_dimension_numbers<[1], [0], [0], [1], [0, 0, 1, 1], [], []>} : vector<8x32xbf16>, vector<32x128xbf16>, vector<8x128xf32> -> vector<8x128xf32>
    %70 = arith.addf %67, %69 : vector<8x128xf32>
    %71 = math.tanh %70 : vector<8x128xf32>
    %72 = vector.extract_strided_slice %71 {offsets = [0, 0], sizes = [8, 32], strides = [1, 1]} : vector<8x128xf32> to vector<8x32xf32>
    %cst_37 = arith.constant 1.000000e+00 : f32
    %73 = vector.broadcast %cst_37 : f32 to vector<8x32xf32>
    %74 = arith.addf %72, %73 : vector<8x32xf32>
    %cst_38 = arith.constant 5.000000e-01 : f32
    %75 = vector.broadcast %cst_38 : f32 to vector<8x32xf32>
    %76 = arith.mulf %75, %74 : vector<8x32xf32>
    %77 = vector.extract_strided_slice %71 {offsets = [0, 32], sizes = [8, 32], strides = [1, 1]} : vector<8x128xf32> to vector<8x32xf32>
    %cst_39 = arith.constant 1.000000e+00 : f32
    %78 = vector.broadcast %cst_39 : f32 to vector<8x32xf32>
    %79 = arith.addf %77, %78 : vector<8x32xf32>
    %cst_40 = arith.constant 5.000000e-01 : f32
    %80 = vector.broadcast %cst_40 : f32 to vector<8x32xf32>
    %81 = arith.mulf %80, %79 : vector<8x32xf32>
    %82 = vector.extract_strided_slice %71 {offsets = [0, 64], sizes = [8, 32], strides = [1, 1]} : vector<8x128xf32> to vector<8x32xf32>
    %83 = vector.extract_strided_slice %71 {offsets = [0, 96], sizes = [8, 32], strides = [1, 1]} : vector<8x128xf32> to vector<8x32xf32>
    %cst_41 = arith.constant 1.000000e+00 : f32
    %84 = vector.broadcast %cst_41 : f32 to vector<8x32xf32>
    %85 = arith.addf %83, %84 : vector<8x32xf32>
    %cst_42 = arith.constant 5.000000e-01 : f32
    %86 = vector.broadcast %cst_42 : f32 to vector<8x32xf32>
    %87 = arith.mulf %86, %85 : vector<8x32xf32>
    %88 = arith.mulf %81, %63 : vector<8x32xf32>
    %89 = arith.mulf %76, %82 : vector<8x32xf32>
    %90 = arith.addf %88, %89 : vector<8x32xf32>
    %91 = math.tanh %90 : vector<8x32xf32>
    %92 = arith.mulf %87, %91 : vector<8x32xf32>
    %c16_43 = arith.constant 16 : index
    %c0_44 = arith.constant 0 : index
    %93 = vector.load %arg13[%c16_43, %c0_44] : memref<128x32xf32, #tpu.memory_space<vmem>>, vector<8x32xf32>
    tpu.vector_store %arg13[%c16_43, %c0_44], %92 {strides = array<i32>} : memref<128x32xf32, #tpu.memory_space<vmem>>, vector<8x32xf32>,
    %c24 = arith.constant 24 : index
    %c0_45 = arith.constant 0 : index
    %94 = vector.load %arg12[%c24, %c0_45] : memref<128x128xf32, #tpu.memory_space<vmem>>, vector<8x128xf32>
    %95 = arith.truncf %92 : vector<8x32xf32> to vector<8x32xbf16>
    %cst_46 = arith.constant dense<0.000000e+00> : vector<8x128xf32>
    %96 = tpu.matmul %95, %10, %cst_46 {dimension_numbers = #tpu.dot_dimension_numbers<[1], [0], [0], [1], [0, 0, 1, 1], [], []>} : vector<8x32xbf16>, vector<32x128xbf16>, vector<8x128xf32> -> vector<8x128xf32>
    %97 = arith.addf %94, %96 : vector<8x128xf32>
    %98 = math.tanh %97 : vector<8x128xf32>
    %99 = vector.extract_strided_slice %98 {offsets = [0, 0], sizes = [8, 32], strides = [1, 1]} : vector<8x128xf32> to vector<8x32xf32>
    %cst_47 = arith.constant 1.000000e+00 : f32
    %100 = vector.broadcast %cst_47 : f32 to vector<8x32xf32>
    %101 = arith.addf %99, %100 : vector<8x32xf32>
    %cst_48 = arith.constant 5.000000e-01 : f32
    %102 = vector.broadcast %cst_48 : f32 to vector<8x32xf32>
    %103 = arith.mulf %102, %101 : vector<8x32xf32>
    %104 = vector.extract_strided_slice %98 {offsets = [0, 32], sizes = [8, 32], strides = [1, 1]} : vector<8x128xf32> to vector<8x32xf32>
    %cst_49 = arith.constant 1.000000e+00 : f32
    %105 = vector.broadcast %cst_49 : f32 to vector<8x32xf32>
    %106 = arith.addf %104, %105 : vector<8x32xf32>
    %cst_50 = arith.constant 5.000000e-01 : f32
    %107 = vector.broadcast %cst_50 : f32 to vector<8x32xf32>
    %108 = arith.mulf %107, %106 : vector<8x32xf32>
    %109 = vector.extract_strided_slice %98 {offsets = [0, 64], sizes = [8, 32], strides = [1, 1]} : vector<8x128xf32> to vector<8x32xf32>
    %110 = vector.extract_strided_slice %98 {offsets = [0, 96], sizes = [8, 32], strides = [1, 1]} : vector<8x128xf32> to vector<8x32xf32>
    %cst_51 = arith.constant 1.000000e+00 : f32
    %111 = vector.broadcast %cst_51 : f32 to vector<8x32xf32>
    %112 = arith.addf %110, %111 : vector<8x32xf32>
    %cst_52 = arith.constant 5.000000e-01 : f32
    %113 = vector.broadcast %cst_52 : f32 to vector<8x32xf32>
    %114 = arith.mulf %113, %112 : vector<8x32xf32>
    %115 = arith.mulf %108, %90 : vector<8x32xf32>
    %116 = arith.mulf %103, %109 : vector<8x32xf32>
    %117 = arith.addf %115, %116 : vector<8x32xf32>
    %118 = math.tanh %117 : vector<8x32xf32>
    %119 = arith.mulf %114, %118 : vector<8x32xf32>
    %c24_53 = arith.constant 24 : index
    %c0_54 = arith.constant 0 : index
    %120 = vector.load %arg13[%c24_53, %c0_54] : memref<128x32xf32, #tpu.memory_space<vmem>>, vector<8x32xf32>
    tpu.vector_store %arg13[%c24_53, %c0_54], %119 {strides = array<i32>} : memref<128x32xf32, #tpu.memory_space<vmem>>, vector<8x32xf32>,
    %c32 = arith.constant 32 : index
    %c0_55 = arith.constant 0 : index
    %121 = vector.load %arg12[%c32, %c0_55] : memref<128x128xf32, #tpu.memory_space<vmem>>, vector<8x128xf32>
    %122 = arith.truncf %119 : vector<8x32xf32> to vector<8x32xbf16>
    %cst_56 = arith.constant dense<0.000000e+00> : vector<8x128xf32>
    %123 = tpu.matmul %122, %10, %cst_56 {dimension_numbers = #tpu.dot_dimension_numbers<[1], [0], [0], [1], [0, 0, 1, 1], [], []>} : vector<8x32xbf16>, vector<32x128xbf16>, vector<8x128xf32> -> vector<8x128xf32>
    %124 = arith.addf %121, %123 : vector<8x128xf32>
    %125 = math.tanh %124 : vector<8x128xf32>
    %126 = vector.extract_strided_slice %125 {offsets = [0, 0], sizes = [8, 32], strides = [1, 1]} : vector<8x128xf32> to vector<8x32xf32>
    %cst_57 = arith.constant 1.000000e+00 : f32
    %127 = vector.broadcast %cst_57 : f32 to vector<8x32xf32>
    %128 = arith.addf %126, %127 : vector<8x32xf32>
    %cst_58 = arith.constant 5.000000e-01 : f32
    %129 = vector.broadcast %cst_58 : f32 to vector<8x32xf32>
    %130 = arith.mulf %129, %128 : vector<8x32xf32>
    %131 = vector.extract_strided_slice %125 {offsets = [0, 32], sizes = [8, 32], strides = [1, 1]} : vector<8x128xf32> to vector<8x32xf32>
    %cst_59 = arith.constant 1.000000e+00 : f32
    %132 = vector.broadcast %cst_59 : f32 to vector<8x32xf32>
    %133 = arith.addf %131, %132 : vector<8x32xf32>
    %cst_60 = arith.constant 5.000000e-01 : f32
    %134 = vector.broadcast %cst_60 : f32 to vector<8x32xf32>
    %135 = arith.mulf %134, %133 : vector<8x32xf32>
    %136 = vector.extract_strided_slice %125 {offsets = [0, 64], sizes = [8, 32], strides = [1, 1]} : vector<8x128xf32> to vector<8x32xf32>
    %137 = vector.extract_strided_slice %125 {offsets = [0, 96], sizes = [8, 32], strides = [1, 1]} : vector<8x128xf32> to vector<8x32xf32>
    %cst_61 = arith.constant 1.000000e+00 : f32
    %138 = vector.broadcast %cst_61 : f32 to vector<8x32xf32>
    %139 = arith.addf %137, %138 : vector<8x32xf32>
    %cst_62 = arith.constant 5.000000e-01 : f32
    %140 = vector.broadcast %cst_62 : f32 to vector<8x32xf32>
    %141 = arith.mulf %140, %139 : vector<8x32xf32>
    %142 = arith.mulf %135, %117 : vector<8x32xf32>
    %143 = arith.mulf %130, %136 : vector<8x32xf32>
    %144 = arith.addf %142, %143 : vector<8x32xf32>
    %145 = math.tanh %144 : vector<8x32xf32>
    %146 = arith.mulf %141, %145 : vector<8x32xf32>
    %c32_63 = arith.constant 32 : index
    %c0_64 = arith.constant 0 : index
    %147 = vector.load %arg13[%c32_63, %c0_64] : memref<128x32xf32, #tpu.memory_space<vmem>>, vector<8x32xf32>
    tpu.vector_store %arg13[%c32_63, %c0_64], %146 {strides = array<i32>} : memref<128x32xf32, #tpu.memory_space<vmem>>, vector<8x32xf32>,
    %c40 = arith.constant 40 : index
    %c0_65 = arith.constant 0 : index
    %148 = vector.load %arg12[%c40, %c0_65] : memref<128x128xf32, #tpu.memory_space<vmem>>, vector<8x128xf32>
    %149 = arith.truncf %146 : vector<8x32xf32> to vector<8x32xbf16>
    %cst_66 = arith.constant dense<0.000000e+00> : vector<8x128xf32>
    %150 = tpu.matmul %149, %10, %cst_66 {dimension_numbers = #tpu.dot_dimension_numbers<[1], [0], [0], [1], [0, 0, 1, 1], [], []>} : vector<8x32xbf16>, vector<32x128xbf16>, vector<8x128xf32> -> vector<8x128xf32>
    %151 = arith.addf %148, %150 : vector<8x128xf32>
    %152 = math.tanh %151 : vector<8x128xf32>
    %153 = vector.extract_strided_slice %152 {offsets = [0, 0], sizes = [8, 32], strides = [1, 1]} : vector<8x128xf32> to vector<8x32xf32>
    %cst_67 = arith.constant 1.000000e+00 : f32
    %154 = vector.broadcast %cst_67 : f32 to vector<8x32xf32>
    %155 = arith.addf %153, %154 : vector<8x32xf32>
    %cst_68 = arith.constant 5.000000e-01 : f32
    %156 = vector.broadcast %cst_68 : f32 to vector<8x32xf32>
    %157 = arith.mulf %156, %155 : vector<8x32xf32>
    %158 = vector.extract_strided_slice %152 {offsets = [0, 32], sizes = [8, 32], strides = [1, 1]} : vector<8x128xf32> to vector<8x32xf32>
    %cst_69 = arith.constant 1.000000e+00 : f32
    %159 = vector.broadcast %cst_69 : f32 to vector<8x32xf32>
    %160 = arith.addf %158, %159 : vector<8x32xf32>
    %cst_70 = arith.constant 5.000000e-01 : f32
    %161 = vector.broadcast %cst_70 : f32 to vector<8x32xf32>
    %162 = arith.mulf %161, %160 : vector<8x32xf32>
    %163 = vector.extract_strided_slice %152 {offsets = [0, 64], sizes = [8, 32], strides = [1, 1]} : vector<8x128xf32> to vector<8x32xf32>
    %164 = vector.extract_strided_slice %152 {offsets = [0, 96], sizes = [8, 32], strides = [1, 1]} : vector<8x128xf32> to vector<8x32xf32>
    %cst_71 = arith.constant 1.000000e+00 : f32
    %165 = vector.broadcast %cst_71 : f32 to vector<8x32xf32>
    %166 = arith.addf %164, %165 : vector<8x32xf32>
    %cst_72 = arith.constant 5.000000e-01 : f32
    %167 = vector.broadcast %cst_72 : f32 to vector<8x32xf32>
    %168 = arith.mulf %167, %166 : vector<8x32xf32>
    %169 = arith.mulf %162, %144 : vector<8x32xf32>
    %170 = arith.mulf %157, %163 : vector<8x32xf32>
    %171 = arith.addf %169, %170 : vector<8x32xf32>
    %172 = math.tanh %171 : vector<8x32xf32>
    %173 = arith.mulf %168, %172 : vector<8x32xf32>
    %c40_73 = arith.constant 40 : index
    %c0_74 = arith.constant 0 : index
    %174 = vector.load %arg13[%c40_73, %c0_74] : memref<128x32xf32, #tpu.memory_space<vmem>>, vector<8x32xf32>
    tpu.vector_store %arg13[%c40_73, %c0_74], %173 {strides = array<i32>} : memref<128x32xf32, #tpu.memory_space<vmem>>, vector<8x32xf32>,
    %c48 = arith.constant 48 : index
    %c0_75 = arith.constant 0 : index
    %175 = vector.load %arg12[%c48, %c0_75] : memref<128x128xf32, #tpu.memory_space<vmem>>, vector<8x128xf32>
    %176 = arith.truncf %173 : vector<8x32xf32> to vector<8x32xbf16>
    %cst_76 = arith.constant dense<0.000000e+00> : vector<8x128xf32>
    %177 = tpu.matmul %176, %10, %cst_76 {dimension_numbers = #tpu.dot_dimension_numbers<[1], [0], [0], [1], [0, 0, 1, 1], [], []>} : vector<8x32xbf16>, vector<32x128xbf16>, vector<8x128xf32> -> vector<8x128xf32>
    %178 = arith.addf %175, %177 : vector<8x128xf32>
    %179 = math.tanh %178 : vector<8x128xf32>
    %180 = vector.extract_strided_slice %179 {offsets = [0, 0], sizes = [8, 32], strides = [1, 1]} : vector<8x128xf32> to vector<8x32xf32>
    %cst_77 = arith.constant 1.000000e+00 : f32
    %181 = vector.broadcast %cst_77 : f32 to vector<8x32xf32>
    %182 = arith.addf %180, %181 : vector<8x32xf32>
    %cst_78 = arith.constant 5.000000e-01 : f32
    %183 = vector.broadcast %cst_78 : f32 to vector<8x32xf32>
    %184 = arith.mulf %183, %182 : vector<8x32xf32>
    %185 = vector.extract_strided_slice %179 {offsets = [0, 32], sizes = [8, 32], strides = [1, 1]} : vector<8x128xf32> to vector<8x32xf32>
    %cst_79 = arith.constant 1.000000e+00 : f32
    %186 = vector.broadcast %cst_79 : f32 to vector<8x32xf32>
    %187 = arith.addf %185, %186 : vector<8x32xf32>
    %cst_80 = arith.constant 5.000000e-01 : f32
    %188 = vector.broadcast %cst_80 : f32 to vector<8x32xf32>
    %189 = arith.mulf %188, %187 : vector<8x32xf32>
    %190 = vector.extract_strided_slice %179 {offsets = [0, 64], sizes = [8, 32], strides = [1, 1]} : vector<8x128xf32> to vector<8x32xf32>
    %191 = vector.extract_strided_slice %179 {offsets = [0, 96], sizes = [8, 32], strides = [1, 1]} : vector<8x128xf32> to vector<8x32xf32>
    %cst_81 = arith.constant 1.000000e+00 : f32
    %192 = vector.broadcast %cst_81 : f32 to vector<8x32xf32>
    %193 = arith.addf %191, %192 : vector<8x32xf32>
    %cst_82 = arith.constant 5.000000e-01 : f32
    %194 = vector.broadcast %cst_82 : f32 to vector<8x32xf32>
    %195 = arith.mulf %194, %193 : vector<8x32xf32>
    %196 = arith.mulf %189, %171 : vector<8x32xf32>
    %197 = arith.mulf %184, %190 : vector<8x32xf32>
    %198 = arith.addf %196, %197 : vector<8x32xf32>
    %199 = math.tanh %198 : vector<8x32xf32>
    %200 = arith.mulf %195, %199 : vector<8x32xf32>
    %c48_83 = arith.constant 48 : index
    %c0_84 = arith.constant 0 : index
    %201 = vector.load %arg13[%c48_83, %c0_84] : memref<128x32xf32, #tpu.memory_space<vmem>>, vector<8x32xf32>
    tpu.vector_store %arg13[%c48_83, %c0_84], %200 {strides = array<i32>} : memref<128x32xf32, #tpu.memory_space<vmem>>, vector<8x32xf32>,
    %c56 = arith.constant 56 : index
    %c0_85 = arith.constant 0 : index
    %202 = vector.load %arg12[%c56, %c0_85] : memref<128x128xf32, #tpu.memory_space<vmem>>, vector<8x128xf32>
    %203 = arith.truncf %200 : vector<8x32xf32> to vector<8x32xbf16>
    %cst_86 = arith.constant dense<0.000000e+00> : vector<8x128xf32>
    %204 = tpu.matmul %203, %10, %cst_86 {dimension_numbers = #tpu.dot_dimension_numbers<[1], [0], [0], [1], [0, 0, 1, 1], [], []>} : vector<8x32xbf16>, vector<32x128xbf16>, vector<8x128xf32> -> vector<8x128xf32>
    %205 = arith.addf %202, %204 : vector<8x128xf32>
    %206 = math.tanh %205 : vector<8x128xf32>
    %207 = vector.extract_strided_slice %206 {offsets = [0, 0], sizes = [8, 32], strides = [1, 1]} : vector<8x128xf32> to vector<8x32xf32>
    %cst_87 = arith.constant 1.000000e+00 : f32
    %208 = vector.broadcast %cst_87 : f32 to vector<8x32xf32>
    %209 = arith.addf %207, %208 : vector<8x32xf32>
    %cst_88 = arith.constant 5.000000e-01 : f32
    %210 = vector.broadcast %cst_88 : f32 to vector<8x32xf32>
    %211 = arith.mulf %210, %209 : vector<8x32xf32>
    %212 = vector.extract_strided_slice %206 {offsets = [0, 32], sizes = [8, 32], strides = [1, 1]} : vector<8x128xf32> to vector<8x32xf32>
    %cst_89 = arith.constant 1.000000e+00 : f32
    %213 = vector.broadcast %cst_89 : f32 to vector<8x32xf32>
    %214 = arith.addf %212, %213 : vector<8x32xf32>
    %cst_90 = arith.constant 5.000000e-01 : f32
    %215 = vector.broadcast %cst_90 : f32 to vector<8x32xf32>
    %216 = arith.mulf %215, %214 : vector<8x32xf32>
    %217 = vector.extract_strided_slice %206 {offsets = [0, 64], sizes = [8, 32], strides = [1, 1]} : vector<8x128xf32> to vector<8x32xf32>
    %218 = vector.extract_strided_slice %206 {offsets = [0, 96], sizes = [8, 32], strides = [1, 1]} : vector<8x128xf32> to vector<8x32xf32>
    %cst_91 = arith.constant 1.000000e+00 : f32
    %219 = vector.broadcast %cst_91 : f32 to vector<8x32xf32>
    %220 = arith.addf %218, %219 : vector<8x32xf32>
    %cst_92 = arith.constant 5.000000e-01 : f32
    %221 = vector.broadcast %cst_92 : f32 to vector<8x32xf32>
    %222 = arith.mulf %221, %220 : vector<8x32xf32>
    %223 = arith.mulf %216, %198 : vector<8x32xf32>
    %224 = arith.mulf %211, %217 : vector<8x32xf32>
    %225 = arith.addf %223, %224 : vector<8x32xf32>
    %226 = math.tanh %225 : vector<8x32xf32>
    %227 = arith.mulf %222, %226 : vector<8x32xf32>
    %c56_93 = arith.constant 56 : index
    %c0_94 = arith.constant 0 : index
    %228 = vector.load %arg13[%c56_93, %c0_94] : memref<128x32xf32, #tpu.memory_space<vmem>>, vector<8x32xf32>
    tpu.vector_store %arg13[%c56_93, %c0_94], %227 {strides = array<i32>} : memref<128x32xf32, #tpu.memory_space<vmem>>, vector<8x32xf32>,
    %c64 = arith.constant 64 : index
    %c0_95 = arith.constant 0 : index
    %229 = vector.load %arg12[%c64, %c0_95] : memref<128x128xf32, #tpu.memory_space<vmem>>, vector<8x128xf32>
    %230 = arith.truncf %227 : vector<8x32xf32> to vector<8x32xbf16>
    %cst_96 = arith.constant dense<0.000000e+00> : vector<8x128xf32>
    %231 = tpu.matmul %230, %10, %cst_96 {dimension_numbers = #tpu.dot_dimension_numbers<[1], [0], [0], [1], [0, 0, 1, 1], [], []>} : vector<8x32xbf16>, vector<32x128xbf16>, vector<8x128xf32> -> vector<8x128xf32>
    %232 = arith.addf %229, %231 : vector<8x128xf32>
    %233 = math.tanh %232 : vector<8x128xf32>
    %234 = vector.extract_strided_slice %233 {offsets = [0, 0], sizes = [8, 32], strides = [1, 1]} : vector<8x128xf32> to vector<8x32xf32>
    %cst_97 = arith.constant 1.000000e+00 : f32
    %235 = vector.broadcast %cst_97 : f32 to vector<8x32xf32>
    %236 = arith.addf %234, %235 : vector<8x32xf32>
    %cst_98 = arith.constant 5.000000e-01 : f32
    %237 = vector.broadcast %cst_98 : f32 to vector<8x32xf32>
    %238 = arith.mulf %237, %236 : vector<8x32xf32>
    %239 = vector.extract_strided_slice %233 {offsets = [0, 32], sizes = [8, 32], strides = [1, 1]} : vector<8x128xf32> to vector<8x32xf32>
    %cst_99 = arith.constant 1.000000e+00 : f32
    %240 = vector.broadcast %cst_99 : f32 to vector<8x32xf32>
    %241 = arith.addf %239, %240 : vector<8x32xf32>
    %cst_100 = arith.constant 5.000000e-01 : f32
    %242 = vector.broadcast %cst_100 : f32 to vector<8x32xf32>
    %243 = arith.mulf %242, %241 : vector<8x32xf32>
    %244 = vector.extract_strided_slice %233 {offsets = [0, 64], sizes = [8, 32], strides = [1, 1]} : vector<8x128xf32> to vector<8x32xf32>
    %245 = vector.extract_strided_slice %233 {offsets = [0, 96], sizes = [8, 32], strides = [1, 1]} : vector<8x128xf32> to vector<8x32xf32>
    %cst_101 = arith.constant 1.000000e+00 : f32
    %246 = vector.broadcast %cst_101 : f32 to vector<8x32xf32>
    %247 = arith.addf %245, %246 : vector<8x32xf32>
    %cst_102 = arith.constant 5.000000e-01 : f32
    %248 = vector.broadcast %cst_102 : f32 to vector<8x32xf32>
    %249 = arith.mulf %248, %247 : vector<8x32xf32>
    %250 = arith.mulf %243, %225 : vector<8x32xf32>
    %251 = arith.mulf %238, %244 : vector<8x32xf32>
    %252 = arith.addf %250, %251 : vector<8x32xf32>
    %253 = math.tanh %252 : vector<8x32xf32>
    %254 = arith.mulf %249, %253 : vector<8x32xf32>
    %c64_103 = arith.constant 64 : index
    %c0_104 = arith.constant 0 : index
    %255 = vector.load %arg13[%c64_103, %c0_104] : memref<128x32xf32, #tpu.memory_space<vmem>>, vector<8x32xf32>
    tpu.vector_store %arg13[%c64_103, %c0_104], %254 {strides = array<i32>} : memref<128x32xf32, #tpu.memory_space<vmem>>, vector<8x32xf32>,
    %c72 = arith.constant 72 : index
    %c0_105 = arith.constant 0 : index
    %256 = vector.load %arg12[%c72, %c0_105] : memref<128x128xf32, #tpu.memory_space<vmem>>, vector<8x128xf32>
    %257 = arith.truncf %254 : vector<8x32xf32> to vector<8x32xbf16>
    %cst_106 = arith.constant dense<0.000000e+00> : vector<8x128xf32>
    %258 = tpu.matmul %257, %10, %cst_106 {dimension_numbers = #tpu.dot_dimension_numbers<[1], [0], [0], [1], [0, 0, 1, 1], [], []>} : vector<8x32xbf16>, vector<32x128xbf16>, vector<8x128xf32> -> vector<8x128xf32>
    %259 = arith.addf %256, %258 : vector<8x128xf32>
    %260 = math.tanh %259 : vector<8x128xf32>
    %261 = vector.extract_strided_slice %260 {offsets = [0, 0], sizes = [8, 32], strides = [1, 1]} : vector<8x128xf32> to vector<8x32xf32>
    %cst_107 = arith.constant 1.000000e+00 : f32
    %262 = vector.broadcast %cst_107 : f32 to vector<8x32xf32>
    %263 = arith.addf %261, %262 : vector<8x32xf32>
    %cst_108 = arith.constant 5.000000e-01 : f32
    %264 = vector.broadcast %cst_108 : f32 to vector<8x32xf32>
    %265 = arith.mulf %264, %263 : vector<8x32xf32>
    %266 = vector.extract_strided_slice %260 {offsets = [0, 32], sizes = [8, 32], strides = [1, 1]} : vector<8x128xf32> to vector<8x32xf32>
    %cst_109 = arith.constant 1.000000e+00 : f32
    %267 = vector.broadcast %cst_109 : f32 to vector<8x32xf32>
    %268 = arith.addf %266, %267 : vector<8x32xf32>
    %cst_110 = arith.constant 5.000000e-01 : f32
    %269 = vector.broadcast %cst_110 : f32 to vector<8x32xf32>
    %270 = arith.mulf %269, %268 : vector<8x32xf32>
    %271 = vector.extract_strided_slice %260 {offsets = [0, 64], sizes = [8, 32], strides = [1, 1]} : vector<8x128xf32> to vector<8x32xf32>
    %272 = vector.extract_strided_slice %260 {offsets = [0, 96], sizes = [8, 32], strides = [1, 1]} : vector<8x128xf32> to vector<8x32xf32>
    %cst_111 = arith.constant 1.000000e+00 : f32
    %273 = vector.broadcast %cst_111 : f32 to vector<8x32xf32>
    %274 = arith.addf %272, %273 : vector<8x32xf32>
    %cst_112 = arith.constant 5.000000e-01 : f32
    %275 = vector.broadcast %cst_112 : f32 to vector<8x32xf32>
    %276 = arith.mulf %275, %274 : vector<8x32xf32>
    %277 = arith.mulf %270, %252 : vector<8x32xf32>
    %278 = arith.mulf %265, %271 : vector<8x32xf32>
    %279 = arith.addf %277, %278 : vector<8x32xf32>
    %280 = math.tanh %279 : vector<8x32xf32>
    %281 = arith.mulf %276, %280 : vector<8x32xf32>
    %c72_113 = arith.constant 72 : index
    %c0_114 = arith.constant 0 : index
    %282 = vector.load %arg13[%c72_113, %c0_114] : memref<128x32xf32, #tpu.memory_space<vmem>>, vector<8x32xf32>
    tpu.vector_store %arg13[%c72_113, %c0_114], %281 {strides = array<i32>} : memref<128x32xf32, #tpu.memory_space<vmem>>, vector<8x32xf32>,
    %c80 = arith.constant 80 : index
    %c0_115 = arith.constant 0 : index
    %283 = vector.load %arg12[%c80, %c0_115] : memref<128x128xf32, #tpu.memory_space<vmem>>, vector<8x128xf32>
    %284 = arith.truncf %281 : vector<8x32xf32> to vector<8x32xbf16>
    %cst_116 = arith.constant dense<0.000000e+00> : vector<8x128xf32>
    %285 = tpu.matmul %284, %10, %cst_116 {dimension_numbers = #tpu.dot_dimension_numbers<[1], [0], [0], [1], [0, 0, 1, 1], [], []>} : vector<8x32xbf16>, vector<32x128xbf16>, vector<8x128xf32> -> vector<8x128xf32>
    %286 = arith.addf %283, %285 : vector<8x128xf32>
    %287 = math.tanh %286 : vector<8x128xf32>
    %288 = vector.extract_strided_slice %287 {offsets = [0, 0], sizes = [8, 32], strides = [1, 1]} : vector<8x128xf32> to vector<8x32xf32>
    %cst_117 = arith.constant 1.000000e+00 : f32
    %289 = vector.broadcast %cst_117 : f32 to vector<8x32xf32>
    %290 = arith.addf %288, %289 : vector<8x32xf32>
    %cst_118 = arith.constant 5.000000e-01 : f32
    %291 = vector.broadcast %cst_118 : f32 to vector<8x32xf32>
    %292 = arith.mulf %291, %290 : vector<8x32xf32>
    %293 = vector.extract_strided_slice %287 {offsets = [0, 32], sizes = [8, 32], strides = [1, 1]} : vector<8x128xf32> to vector<8x32xf32>
    %cst_119 = arith.constant 1.000000e+00 : f32
    %294 = vector.broadcast %cst_119 : f32 to vector<8x32xf32>
    %295 = arith.addf %293, %294 : vector<8x32xf32>
    %cst_120 = arith.constant 5.000000e-01 : f32
    %296 = vector.broadcast %cst_120 : f32 to vector<8x32xf32>
    %297 = arith.mulf %296, %295 : vector<8x32xf32>
    %298 = vector.extract_strided_slice %287 {offsets = [0, 64], sizes = [8, 32], strides = [1, 1]} : vector<8x128xf32> to vector<8x32xf32>
    %299 = vector.extract_strided_slice %287 {offsets = [0, 96], sizes = [8, 32], strides = [1, 1]} : vector<8x128xf32> to vector<8x32xf32>
    %cst_121 = arith.constant 1.000000e+00 : f32
    %300 = vector.broadcast %cst_121 : f32 to vector<8x32xf32>
    %301 = arith.addf %299, %300 : vector<8x32xf32>
    %cst_122 = arith.constant 5.000000e-01 : f32
    %302 = vector.broadcast %cst_122 : f32 to vector<8x32xf32>
    %303 = arith.mulf %302, %301 : vector<8x32xf32>
    %304 = arith.mulf %297, %279 : vector<8x32xf32>
    %305 = arith.mulf %292, %298 : vector<8x32xf32>
    %306 = arith.addf %304, %305 : vector<8x32xf32>
    %307 = math.tanh %306 : vector<8x32xf32>
    %308 = arith.mulf %303, %307 : vector<8x32xf32>
    %c80_123 = arith.constant 80 : index
    %c0_124 = arith.constant 0 : index
    %309 = vector.load %arg13[%c80_123, %c0_124] : memref<128x32xf32, #tpu.memory_space<vmem>>, vector<8x32xf32>
    tpu.vector_store %arg13[%c80_123, %c0_124], %308 {strides = array<i32>} : memref<128x32xf32, #tpu.memory_space<vmem>>, vector<8x32xf32>,
    %c88 = arith.constant 88 : index
    %c0_125 = arith.constant 0 : index
    %310 = vector.load %arg12[%c88, %c0_125] : memref<128x128xf32, #tpu.memory_space<vmem>>, vector<8x128xf32>
    %311 = arith.truncf %308 : vector<8x32xf32> to vector<8x32xbf16>
    %cst_126 = arith.constant dense<0.000000e+00> : vector<8x128xf32>
    %312 = tpu.matmul %311, %10, %cst_126 {dimension_numbers = #tpu.dot_dimension_numbers<[1], [0], [0], [1], [0, 0, 1, 1], [], []>} : vector<8x32xbf16>, vector<32x128xbf16>, vector<8x128xf32> -> vector<8x128xf32>
    %313 = arith.addf %310, %312 : vector<8x128xf32>
    %314 = math.tanh %313 : vector<8x128xf32>
    %315 = vector.extract_strided_slice %314 {offsets = [0, 0], sizes = [8, 32], strides = [1, 1]} : vector<8x128xf32> to vector<8x32xf32>
    %cst_127 = arith.constant 1.000000e+00 : f32
    %316 = vector.broadcast %cst_127 : f32 to vector<8x32xf32>
    %317 = arith.addf %315, %316 : vector<8x32xf32>
    %cst_128 = arith.constant 5.000000e-01 : f32
    %318 = vector.broadcast %cst_128 : f32 to vector<8x32xf32>
    %319 = arith.mulf %318, %317 : vector<8x32xf32>
    %320 = vector.extract_strided_slice %314 {offsets = [0, 32], sizes = [8, 32], strides = [1, 1]} : vector<8x128xf32> to vector<8x32xf32>
    %cst_129 = arith.constant 1.000000e+00 : f32
    %321 = vector.broadcast %cst_129 : f32 to vector<8x32xf32>
    %322 = arith.addf %320, %321 : vector<8x32xf32>
    %cst_130 = arith.constant 5.000000e-01 : f32
    %323 = vector.broadcast %cst_130 : f32 to vector<8x32xf32>
    %324 = arith.mulf %323, %322 : vector<8x32xf32>
    %325 = vector.extract_strided_slice %314 {offsets = [0, 64], sizes = [8, 32], strides = [1, 1]} : vector<8x128xf32> to vector<8x32xf32>
    %326 = vector.extract_strided_slice %314 {offsets = [0, 96], sizes = [8, 32], strides = [1, 1]} : vector<8x128xf32> to vector<8x32xf32>
    %cst_131 = arith.constant 1.000000e+00 : f32
    %327 = vector.broadcast %cst_131 : f32 to vector<8x32xf32>
    %328 = arith.addf %326, %327 : vector<8x32xf32>
    %cst_132 = arith.constant 5.000000e-01 : f32
    %329 = vector.broadcast %cst_132 : f32 to vector<8x32xf32>
    %330 = arith.mulf %329, %328 : vector<8x32xf32>
    %331 = arith.mulf %324, %306 : vector<8x32xf32>
    %332 = arith.mulf %319, %325 : vector<8x32xf32>
    %333 = arith.addf %331, %332 : vector<8x32xf32>
    %334 = math.tanh %333 : vector<8x32xf32>
    %335 = arith.mulf %330, %334 : vector<8x32xf32>
    %c88_133 = arith.constant 88 : index
    %c0_134 = arith.constant 0 : index
    %336 = vector.load %arg13[%c88_133, %c0_134] : memref<128x32xf32, #tpu.memory_space<vmem>>, vector<8x32xf32>
    tpu.vector_store %arg13[%c88_133, %c0_134], %335 {strides = array<i32>} : memref<128x32xf32, #tpu.memory_space<vmem>>, vector<8x32xf32>,
    %c96 = arith.constant 96 : index
    %c0_135 = arith.constant 0 : index
    %337 = vector.load %arg12[%c96, %c0_135] : memref<128x128xf32, #tpu.memory_space<vmem>>, vector<8x128xf32>
    %338 = arith.truncf %335 : vector<8x32xf32> to vector<8x32xbf16>
    %cst_136 = arith.constant dense<0.000000e+00> : vector<8x128xf32>
    %339 = tpu.matmul %338, %10, %cst_136 {dimension_numbers = #tpu.dot_dimension_numbers<[1], [0], [0], [1], [0, 0, 1, 1], [], []>} : vector<8x32xbf16>, vector<32x128xbf16>, vector<8x128xf32> -> vector<8x128xf32>
    %340 = arith.addf %337, %339 : vector<8x128xf32>
    %341 = math.tanh %340 : vector<8x128xf32>
    %342 = vector.extract_strided_slice %341 {offsets = [0, 0], sizes = [8, 32], strides = [1, 1]} : vector<8x128xf32> to vector<8x32xf32>
    %cst_137 = arith.constant 1.000000e+00 : f32
    %343 = vector.broadcast %cst_137 : f32 to vector<8x32xf32>
    %344 = arith.addf %342, %343 : vector<8x32xf32>
    %cst_138 = arith.constant 5.000000e-01 : f32
    %345 = vector.broadcast %cst_138 : f32 to vector<8x32xf32>
    %346 = arith.mulf %345, %344 : vector<8x32xf32>
    %347 = vector.extract_strided_slice %341 {offsets = [0, 32], sizes = [8, 32], strides = [1, 1]} : vector<8x128xf32> to vector<8x32xf32>
    %cst_139 = arith.constant 1.000000e+00 : f32
    %348 = vector.broadcast %cst_139 : f32 to vector<8x32xf32>
    %349 = arith.addf %347, %348 : vector<8x32xf32>
    %cst_140 = arith.constant 5.000000e-01 : f32
    %350 = vector.broadcast %cst_140 : f32 to vector<8x32xf32>
    %351 = arith.mulf %350, %349 : vector<8x32xf32>
    %352 = vector.extract_strided_slice %341 {offsets = [0, 64], sizes = [8, 32], strides = [1, 1]} : vector<8x128xf32> to vector<8x32xf32>
    %353 = vector.extract_strided_slice %341 {offsets = [0, 96], sizes = [8, 32], strides = [1, 1]} : vector<8x128xf32> to vector<8x32xf32>
    %cst_141 = arith.constant 1.000000e+00 : f32
    %354 = vector.broadcast %cst_141 : f32 to vector<8x32xf32>
    %355 = arith.addf %353, %354 : vector<8x32xf32>
    %cst_142 = arith.constant 5.000000e-01 : f32
    %356 = vector.broadcast %cst_142 : f32 to vector<8x32xf32>
    %357 = arith.mulf %356, %355 : vector<8x32xf32>
    %358 = arith.mulf %351, %333 : vector<8x32xf32>
    %359 = arith.mulf %346, %352 : vector<8x32xf32>
    %360 = arith.addf %358, %359 : vector<8x32xf32>
    %361 = math.tanh %360 : vector<8x32xf32>
    %362 = arith.mulf %357, %361 : vector<8x32xf32>
    %c96_143 = arith.constant 96 : index
    %c0_144 = arith.constant 0 : index
    %363 = vector.load %arg13[%c96_143, %c0_144] : memref<128x32xf32, #tpu.memory_space<vmem>>, vector<8x32xf32>
    tpu.vector_store %arg13[%c96_143, %c0_144], %362 {strides = array<i32>} : memref<128x32xf32, #tpu.memory_space<vmem>>, vector<8x32xf32>,
    %c104 = arith.constant 104 : index
    %c0_145 = arith.constant 0 : index
    %364 = vector.load %arg12[%c104, %c0_145] : memref<128x128xf32, #tpu.memory_space<vmem>>, vector<8x128xf32>
    %365 = arith.truncf %362 : vector<8x32xf32> to vector<8x32xbf16>
    %cst_146 = arith.constant dense<0.000000e+00> : vector<8x128xf32>
    %366 = tpu.matmul %365, %10, %cst_146 {dimension_numbers = #tpu.dot_dimension_numbers<[1], [0], [0], [1], [0, 0, 1, 1], [], []>} : vector<8x32xbf16>, vector<32x128xbf16>, vector<8x128xf32> -> vector<8x128xf32>
    %367 = arith.addf %364, %366 : vector<8x128xf32>
    %368 = math.tanh %367 : vector<8x128xf32>
    %369 = vector.extract_strided_slice %368 {offsets = [0, 0], sizes = [8, 32], strides = [1, 1]} : vector<8x128xf32> to vector<8x32xf32>
    %cst_147 = arith.constant 1.000000e+00 : f32
    %370 = vector.broadcast %cst_147 : f32 to vector<8x32xf32>
    %371 = arith.addf %369, %370 : vector<8x32xf32>
    %cst_148 = arith.constant 5.000000e-01 : f32
    %372 = vector.broadcast %cst_148 : f32 to vector<8x32xf32>
    %373 = arith.mulf %372, %371 : vector<8x32xf32>
    %374 = vector.extract_strided_slice %368 {offsets = [0, 32], sizes = [8, 32], strides = [1, 1]} : vector<8x128xf32> to vector<8x32xf32>
    %cst_149 = arith.constant 1.000000e+00 : f32
    %375 = vector.broadcast %cst_149 : f32 to vector<8x32xf32>
    %376 = arith.addf %374, %375 : vector<8x32xf32>
    %cst_150 = arith.constant 5.000000e-01 : f32
    %377 = vector.broadcast %cst_150 : f32 to vector<8x32xf32>
    %378 = arith.mulf %377, %376 : vector<8x32xf32>
    %379 = vector.extract_strided_slice %368 {offsets = [0, 64], sizes = [8, 32], strides = [1, 1]} : vector<8x128xf32> to vector<8x32xf32>
    %380 = vector.extract_strided_slice %368 {offsets = [0, 96], sizes = [8, 32], strides = [1, 1]} : vector<8x128xf32> to vector<8x32xf32>
    %cst_151 = arith.constant 1.000000e+00 : f32
    %381 = vector.broadcast %cst_151 : f32 to vector<8x32xf32>
    %382 = arith.addf %380, %381 : vector<8x32xf32>
    %cst_152 = arith.constant 5.000000e-01 : f32
    %383 = vector.broadcast %cst_152 : f32 to vector<8x32xf32>
    %384 = arith.mulf %383, %382 : vector<8x32xf32>
    %385 = arith.mulf %378, %360 : vector<8x32xf32>
    %386 = arith.mulf %373, %379 : vector<8x32xf32>
    %387 = arith.addf %385, %386 : vector<8x32xf32>
    %388 = math.tanh %387 : vector<8x32xf32>
    %389 = arith.mulf %384, %388 : vector<8x32xf32>
    %c104_153 = arith.constant 104 : index
    %c0_154 = arith.constant 0 : index
    %390 = vector.load %arg13[%c104_153, %c0_154] : memref<128x32xf32, #tpu.memory_space<vmem>>, vector<8x32xf32>
    tpu.vector_store %arg13[%c104_153, %c0_154], %389 {strides = array<i32>} : memref<128x32xf32, #tpu.memory_space<vmem>>, vector<8x32xf32>,
    %c112 = arith.constant 112 : index
    %c0_155 = arith.constant 0 : index
    %391 = vector.load %arg12[%c112, %c0_155] : memref<128x128xf32, #tpu.memory_space<vmem>>, vector<8x128xf32>
    %392 = arith.truncf %389 : vector<8x32xf32> to vector<8x32xbf16>
    %cst_156 = arith.constant dense<0.000000e+00> : vector<8x128xf32>
    %393 = tpu.matmul %392, %10, %cst_156 {dimension_numbers = #tpu.dot_dimension_numbers<[1], [0], [0], [1], [0, 0, 1, 1], [], []>} : vector<8x32xbf16>, vector<32x128xbf16>, vector<8x128xf32> -> vector<8x128xf32>
    %394 = arith.addf %391, %393 : vector<8x128xf32>
    %395 = math.tanh %394 : vector<8x128xf32>
    %396 = vector.extract_strided_slice %395 {offsets = [0, 0], sizes = [8, 32], strides = [1, 1]} : vector<8x128xf32> to vector<8x32xf32>
    %cst_157 = arith.constant 1.000000e+00 : f32
    %397 = vector.broadcast %cst_157 : f32 to vector<8x32xf32>
    %398 = arith.addf %396, %397 : vector<8x32xf32>
    %cst_158 = arith.constant 5.000000e-01 : f32
    %399 = vector.broadcast %cst_158 : f32 to vector<8x32xf32>
    %400 = arith.mulf %399, %398 : vector<8x32xf32>
    %401 = vector.extract_strided_slice %395 {offsets = [0, 32], sizes = [8, 32], strides = [1, 1]} : vector<8x128xf32> to vector<8x32xf32>
    %cst_159 = arith.constant 1.000000e+00 : f32
    %402 = vector.broadcast %cst_159 : f32 to vector<8x32xf32>
    %403 = arith.addf %401, %402 : vector<8x32xf32>
    %cst_160 = arith.constant 5.000000e-01 : f32
    %404 = vector.broadcast %cst_160 : f32 to vector<8x32xf32>
    %405 = arith.mulf %404, %403 : vector<8x32xf32>
    %406 = vector.extract_strided_slice %395 {offsets = [0, 64], sizes = [8, 32], strides = [1, 1]} : vector<8x128xf32> to vector<8x32xf32>
    %407 = vector.extract_strided_slice %395 {offsets = [0, 96], sizes = [8, 32], strides = [1, 1]} : vector<8x128xf32> to vector<8x32xf32>
    %cst_161 = arith.constant 1.000000e+00 : f32
    %408 = vector.broadcast %cst_161 : f32 to vector<8x32xf32>
    %409 = arith.addf %407, %408 : vector<8x32xf32>
    %cst_162 = arith.constant 5.000000e-01 : f32
    %410 = vector.broadcast %cst_162 : f32 to vector<8x32xf32>
    %411 = arith.mulf %410, %409 : vector<8x32xf32>
    %412 = arith.mulf %405, %387 : vector<8x32xf32>
    %413 = arith.mulf %400, %406 : vector<8x32xf32>
    %414 = arith.addf %412, %413 : vector<8x32xf32>
    %415 = math.tanh %414 : vector<8x32xf32>
    %416 = arith.mulf %411, %415 : vector<8x32xf32>
    %c112_163 = arith.constant 112 : index
    %c0_164 = arith.constant 0 : index
    %417 = vector.load %arg13[%c112_163, %c0_164] : memref<128x32xf32, #tpu.memory_space<vmem>>, vector<8x32xf32>
    tpu.vector_store %arg13[%c112_163, %c0_164], %416 {strides = array<i32>} : memref<128x32xf32, #tpu.memory_space<vmem>>, vector<8x32xf32>,
    %c120 = arith.constant 120 : index
    %c0_165 = arith.constant 0 : index
    %418 = vector.load %arg12[%c120, %c0_165] : memref<128x128xf32, #tpu.memory_space<vmem>>, vector<8x128xf32>
    %419 = arith.truncf %416 : vector<8x32xf32> to vector<8x32xbf16>
    %cst_166 = arith.constant dense<0.000000e+00> : vector<8x128xf32>
    %420 = tpu.matmul %419, %10, %cst_166 {dimension_numbers = #tpu.dot_dimension_numbers<[1], [0], [0], [1], [0, 0, 1, 1], [], []>} : vector<8x32xbf16>, vector<32x128xbf16>, vector<8x128xf32> -> vector<8x128xf32>
    %421 = arith.addf %418, %420 : vector<8x128xf32>
    %422 = math.tanh %421 : vector<8x128xf32>
    %423 = vector.extract_strided_slice %422 {offsets = [0, 0], sizes = [8, 32], strides = [1, 1]} : vector<8x128xf32> to vector<8x32xf32>
    %cst_167 = arith.constant 1.000000e+00 : f32
    %424 = vector.broadcast %cst_167 : f32 to vector<8x32xf32>
    %425 = arith.addf %423, %424 : vector<8x32xf32>
    %cst_168 = arith.constant 5.000000e-01 : f32
    %426 = vector.broadcast %cst_168 : f32 to vector<8x32xf32>
    %427 = arith.mulf %426, %425 : vector<8x32xf32>
    %428 = vector.extract_strided_slice %422 {offsets = [0, 32], sizes = [8, 32], strides = [1, 1]} : vector<8x128xf32> to vector<8x32xf32>
    %cst_169 = arith.constant 1.000000e+00 : f32
    %429 = vector.broadcast %cst_169 : f32 to vector<8x32xf32>
    %430 = arith.addf %428, %429 : vector<8x32xf32>
    %cst_170 = arith.constant 5.000000e-01 : f32
    %431 = vector.broadcast %cst_170 : f32 to vector<8x32xf32>
    %432 = arith.mulf %431, %430 : vector<8x32xf32>
    %433 = vector.extract_strided_slice %422 {offsets = [0, 64], sizes = [8, 32], strides = [1, 1]} : vector<8x128xf32> to vector<8x32xf32>
    %434 = vector.extract_strided_slice %422 {offsets = [0, 96], sizes = [8, 32], strides = [1, 1]} : vector<8x128xf32> to vector<8x32xf32>
    %cst_171 = arith.constant 1.000000e+00 : f32
    %435 = vector.broadcast %cst_171 : f32 to vector<8x32xf32>
    %436 = arith.addf %434, %435 : vector<8x32xf32>
    %cst_172 = arith.constant 5.000000e-01 : f32
    %437 = vector.broadcast %cst_172 : f32 to vector<8x32xf32>
    %438 = arith.mulf %437, %436 : vector<8x32xf32>
    %439 = arith.mulf %432, %414 : vector<8x32xf32>
    %440 = arith.mulf %427, %433 : vector<8x32xf32>
    %441 = arith.addf %439, %440 : vector<8x32xf32>
    %442 = math.tanh %441 : vector<8x32xf32>
    %443 = arith.mulf %438, %442 : vector<8x32xf32>
    %c120_173 = arith.constant 120 : index
    %c0_174 = arith.constant 0 : index
    %444 = vector.load %arg13[%c120_173, %c0_174] : memref<128x32xf32, #tpu.memory_space<vmem>>, vector<8x32xf32>
    tpu.vector_store %arg13[%c120_173, %c0_174], %443 {strides = array<i32>} : memref<128x32xf32, #tpu.memory_space<vmem>>, vector<8x32xf32>,
    %c0_175 = arith.constant 0 : index
    %c0_176 = arith.constant 0 : index
    %445 = vector.load %arg10[%c0_175, %c0_176] : memref<8x32xf32, #tpu.memory_space<vmem>>, vector<8x32xf32>
    tpu.vector_store %arg10[%c0_175, %c0_176], %443 {strides = array<i32>} : memref<8x32xf32, #tpu.memory_space<vmem>>, vector<8x32xf32>,
    %c0_177 = arith.constant 0 : index
    %c0_178 = arith.constant 0 : index
    %446 = vector.load %arg11[%c0_177, %c0_178] : memref<8x32xf32, #tpu.memory_space<vmem>>, vector<8x32xf32>
    tpu.vector_store %arg11[%c0_177, %c0_178], %441 {strides = array<i32>} : memref<8x32xf32, #tpu.memory_space<vmem>>, vector<8x32xf32>,
    %c0_179 = arith.constant 0 : index
    %c0_180 = arith.constant 0 : index
    %447 = vector.load %arg13[%c0_179, %c0_180] : memref<128x32xf32, #tpu.memory_space<vmem>>, vector<128x32xf32>
    %448 = arith.truncf %447 : vector<128x32xf32> to vector<128x32xbf16>
    %c0_181 = arith.constant 0 : index
    %c0_182 = arith.constant 0 : index
    %449 = vector.load %arg7[%c0_181, %c0_182] : memref<32x128xbf16, #tpu.memory_space<vmem>>, vector<32x128xbf16>
    %cst_183 = arith.constant dense<0.000000e+00> : vector<128x128xf32>
    %450 = tpu.matmul %448, %449, %cst_183 {dimension_numbers = #tpu.dot_dimension_numbers<[1], [0], [0], [1], [0, 0, 1, 1], [], []>} : vector<128x32xbf16>, vector<32x128xbf16>, vector<128x128xf32> -> vector<128x128xf32>
    %c0_184 = arith.constant 0 : index
    %c0_185 = arith.constant 0 : index
    %451 = vector.load %arg8[%c0_184, %c0_185] : memref<1x128xf32, #tpu.memory_space<vmem>>, vector<1x128xf32>
    %452 = vector.broadcast %451 : vector<1x128xf32> to vector<128x128xf32>
    %453 = arith.addf %450, %452 : vector<128x128xf32>
    %c0_186 = arith.constant 0 : index
    %c0_187 = arith.constant 0 : index
    %454 = vector.load %arg9[%c0_186, %c0_187] : memref<128x128xf32, #tpu.memory_space<vmem>>, vector<128x128xf32>
    tpu.vector_store %arg9[%c0_186, %c0_187], %453 {strides = array<i32>} : memref<128x128xf32, #tpu.memory_space<vmem>>, vector<128x128xf32>,
    return
  }
  func.func @transform_0(%arg0: i32) -> (i32, i32) {
    %c0_i32 = arith.constant 0 : i32
    %c0_i32_0 = arith.constant 0 : i32
    %c0_i32_1 = arith.constant 0 : i32
    return %c0_i32, %c0_i32_0 : i32, i32
  }
  func.func @transform_1(%arg0: i32) -> (i32, i32) {
    %c0_i32 = arith.constant 0 : i32
    %c0_i32_0 = arith.constant 0 : i32
    %c0_i32_1 = arith.constant 0 : i32
    return %c0_i32, %c0_i32_0 : i32, i32
  }
  func.func @transform_2(%arg0: i32) -> (i32, i32) {
    %c0_i32 = arith.constant 0 : i32
    %c0_i32_0 = arith.constant 0 : i32
    %c0_i32_1 = arith.constant 0 : i32
    return %c0_i32, %c0_i32_0 : i32, i32
  }
  func.func @transform_3(%arg0: i32) -> (i32, i32) {
    %c0_i32 = arith.constant 0 : i32
    %c0_i32_0 = arith.constant 0 : i32
    %c0_i32_1 = arith.constant 0 : i32
    return %c0_i32, %c0_i32_0 : i32, i32
  }
  func.func @transform_4(%arg0: i32) -> (i32, i32) {
    %c0_i32 = arith.constant 0 : i32
    %c0_i32_0 = arith.constant 0 : i32
    %c0_i32_1 = arith.constant 0 : i32
    return %c0_i32, %c0_i32_0 : i32, i32
  }
  func.func @transform_5(%arg0: i32) -> (i32, i32) {
    %c0_i32 = arith.constant 0 : i32
    %c0_i32_0 = arith.constant 0 : i32
    %c0_i32_1 = arith.constant 0 : i32
    return %c0_i32, %c0_i32_0 : i32, i32
  }
  func.func @transform_6(%arg0: i32) -> (i32, i32) {
    %c0_i32 = arith.constant 0 : i32
    %c0_i32_0 = arith.constant 0 : i32
    %c0_i32_1 = arith.constant 0 : i32
    return %c0_i32, %c0_i32_0 : i32, i32
  }
  func.func @transform_7(%arg0: i32) -> (i32, i32) {
    %c0_i32 = arith.constant 0 : i32
    %c0_i32_0 = arith.constant 0 : i32
    %c0_i32_1 = arith.constant 0 : i32
    return %c0_i32, %c0_i32_0 : i32, i32
  }
  func.func @transform_8(%arg0: i32) -> (i32, i32) {
    %c0_i32 = arith.constant 0 : i32
    %c0_i32_0 = arith.constant 0 : i32
    %c0_i32_1 = arith.constant 0 : i32
    return %c0_i32, %c0_i32_0 : i32, i32
  }
  func.func @transform_9(%arg0: i32) -> (i32, i32) {
    %c0_i32 = arith.constant 0 : i32
    %c0_i32_0 = arith.constant 0 : i32
    %c0_i32_1 = arith.constant 0 : i32
    return %c0_i32, %c0_i32_0 : i32, i32
  }
  func.func @transform_10(%arg0: i32) -> (i32, i32) {
    %c0_i32 = arith.constant 0 : i32
    %c0_i32_0 = arith.constant 0 : i32
    %c0_i32_1 = arith.constant 0 : i32
    return %c0_i32, %c0_i32_0 : i32, i32
  }
}

</mosaic_0001>

<llo_original>
// kernel: lstm_model_forward.1
$region0: #{lstm_model_forward.1}
  #allocation0 [shape = 'u32[]', space=smem, size = 0x4, offset = 0x4, fixed_abs, tag = 'smem constant byte address 0x4 - core index']
  #allocation1 [shape = 'u32[144,128]{1,0:T(1,128)}', space=vmem, size = 0x12000, scoped, tag = 'internal scratch']
  #allocation2 [shape = 'f32[128,128]{1,0:T(8,128)}', space=vmem, size = 0x10000, scoped, tag = 'scratch operand']
  #allocation3 [shape = 'f32[128,32]{1,0:T(8,128)}', space=vmem, size = 0x10000, scoped, tag = 'scratch operand']
  %s0 = inlined_call_operand.vmem [shape: f32[128,4], index: 0, kind: input, shape index: {}]
  %s1 = inlined_call_operand.vmem [shape: bf16[4,128], index: 1, kind: input, shape index: {}]
  %s2 = inlined_call_operand.vmem [shape: bf16[32,128], index: 2, kind: input, shape index: {}]
  %s3 = inlined_call_operand.vmem [shape: f32[1,128], index: 3, kind: input, shape index: {}]
  %s4 = inlined_call_operand.vmem [shape: f32[8,32], index: 4, kind: input, shape index: {}]
  %s5 = inlined_call_operand.vmem [shape: f32[8,32], index: 5, kind: input, shape index: {}]
  %s6 = inlined_call_operand.vmem [shape: bf16[32,128], index: 6, kind: input, shape index: {}]
  %s7 = inlined_call_operand.vmem [shape: f32[1,128], index: 7, kind: input, shape index: {}]
  %s8 = inlined_call_operand.vmem [shape: f32[128,128], index: 8, kind: output, shape index: {0}]
  %s9 = inlined_call_operand.vmem [shape: f32[8,32], index: 9, kind: output, shape index: {1}]
  %s10 = inlined_call_operand.vmem [shape: f32[8,32], index: 10, kind: output, shape index: {2}]
  %11 = xla_tuple %s8, %s9, %s10
  %s12 = sld [smem:[#allocation0]]
  $region58: #{lstm_model_forward.1} parent=0
    _
  %s14 = ssub.s32 1, %s12
  %s15 = scalar_select 0, %s14, %s12
  // Predicated region
  $region2: #{lstm_model_forward.1} parent=0 // pred_check
    _
  $region3: #{lstm_model_forward.1} parent=0 // pred_check_branch
    %17 = sbr.rel (0) target = $region5
  $region4: #{lstm_model_forward.1} parent=0 // pred_region
    _
  $region5: #{lstm_model_forward.1} parent=0 // pred_fallthru
    _
  // Predicated region
  $region6: #{lstm_model_forward.1} parent=0 // pred_check
    _
  $region7: #{lstm_model_forward.1} parent=0 // pred_check_branch
    %19 = sbr.rel (0) target = $region9
  $region8: #{lstm_model_forward.1} parent=0 // pred_region
    _
  $region9: #{lstm_model_forward.1} parent=0 // pred_fallthru
    _
  // Predicated region
  $region10: #{lstm_model_forward.1} parent=0 // pred_check
    _
  $region11: #{lstm_model_forward.1} parent=0 // pred_check_branch
    %21 = sbr.rel (0) target = $region13
  $region12: #{lstm_model_forward.1} parent=0 // pred_region
    _
  $region13: #{lstm_model_forward.1} parent=0 // pred_fallthru
    _
  // Predicated region
  $region14: #{lstm_model_forward.1} parent=0 // pred_check
    _
  $region15: #{lstm_model_forward.1} parent=0 // pred_check_branch
    %23 = sbr.rel (0) target = $region17
  $region16: #{lstm_model_forward.1} parent=0 // pred_region
    _
  $region17: #{lstm_model_forward.1} parent=0 // pred_fallthru
    _
  // Predicated region
  $region18: #{lstm_model_forward.1} parent=0 // pred_check
    _
  $region19: #{lstm_model_forward.1} parent=0 // pred_check_branch
    %25 = sbr.rel (0) target = $region21
  $region20: #{lstm_model_forward.1} parent=0 // pred_region
    _
  $region21: #{lstm_model_forward.1} parent=0 // pred_fallthru
    _
  // Predicated region
  $region22: #{lstm_model_forward.1} parent=0 // pred_check
    _
  $region23: #{lstm_model_forward.1} parent=0 // pred_check_branch
    %27 = sbr.rel (0) target = $region25
  $region24: #{lstm_model_forward.1} parent=0 // pred_region
    _
  $region25: #{lstm_model_forward.1} parent=0 // pred_fallthru
    _
  // Predicated region
  $region26: #{lstm_model_forward.1} parent=0 // pred_check
    _
  $region27: #{lstm_model_forward.1} parent=0 // pred_check_branch
    %29 = sbr.rel (0) target = $region29
  $region28: #{lstm_model_forward.1} parent=0 // pred_region
    _
  $region29: #{lstm_model_forward.1} parent=0 // pred_fallthru
    _
  // Predicated region
  $region30: #{lstm_model_forward.1} parent=0 // pred_check
    _
  $region31: #{lstm_model_forward.1} parent=0 // pred_check_branch
    %31 = sbr.rel (0) target = $region33
  $region32: #{lstm_model_forward.1} parent=0 // pred_region
    _
  $region33: #{lstm_model_forward.1} parent=0 // pred_fallthru
    _
  %v33 = vld [vmem:[%s0] sm:$0xff]
  %v34 = vld [vmem:[%s0 + $0x8] sm:$0xff]
  %v35 = vld [vmem:[%s0 + $0x10] sm:$0xff]
  %v36 = vld [vmem:[%s0 + $0x18] sm:$0xff]
  %v37 = vld [vmem:[%s0 + $0x20] sm:$0xff]
  %v38 = vld [vmem:[%s0 + $0x28] sm:$0xff]
  %v39 = vld [vmem:[%s0 + $0x30] sm:$0xff]
  %v40 = vld [vmem:[%s0 + $0x38] sm:$0xff]
  %v41 = vld [vmem:[%s0 + $0x40] sm:$0xff]
  %v42 = vld [vmem:[%s0 + $0x48] sm:$0xff]
  %v43 = vld [vmem:[%s0 + $0x50] sm:$0xff]
  %v44 = vld [vmem:[%s0 + $0x58] sm:$0xff]
  %v45 = vld [vmem:[%s0 + $0x60] sm:$0xff]
  %v46 = vld [vmem:[%s0 + $0x68] sm:$0xff]
  %v47 = vld [vmem:[%s0 + $0x70] sm:$0xff]
  %v48 = vld [vmem:[%s0 + $0x78] sm:$0xff]
  %v49 = vmax.f32 %v33, 0.0
  %v50 = vmax.f32 %v34, 0.0
  %v51 = vmax.f32 %v35, 0.0
  %v52 = vmax.f32 %v36, 0.0
  %v53 = vmax.f32 %v37, 0.0
  %v54 = vmax.f32 %v38, 0.0
  %v55 = vmax.f32 %v39, 0.0
  %v56 = vmax.f32 %v40, 0.0
  %v57 = vmax.f32 %v41, 0.0
  %v58 = vmax.f32 %v42, 0.0
  %v59 = vmax.f32 %v43, 0.0
  %v60 = vmax.f32 %v44, 0.0
  %v61 = vmax.f32 %v45, 0.0
  %v62 = vmax.f32 %v46, 0.0
  %v63 = vmax.f32 %v47, 0.0
  %v64 = vmax.f32 %v48, 0.0
  %v65 = vpack.c.bf16 %v50, %v49
  %v66 = vpack.c.bf16 %v52, %v51
  %v67 = vpack.c.bf16 %v54, %v53
  %v68 = vpack.c.bf16 %v56, %v55
  %v69 = vpack.c.bf16 %v58, %v57
  %v70 = vpack.c.bf16 %v60, %v59
  %v71 = vpack.c.bf16 %v62, %v61
  %v72 = vpack.c.bf16 %v64, %v63
  %v73 = vld [vmem:[%s1] sm:$0x3]
  %v74 = vld [vmem:[%s3] sm:$0x1]
  %v76 = vlaneseq
  %v77 = vshrl.u32 %v76, 7
  %v78 = vsub.s32 0, %v77
  %v79 = vrot.slane %v74, %v78
  %vm81 = vcmask 31744
  %v83 = vsel %vm81, %v65, 0
  %v86 = vsel %vm81, %v66, 0
  %v89 = vsel %vm81, %v67, 0
  %v92 = vsel %vm81, %v68, 0
  %v95 = vsel %vm81, %v69, 0
  %v98 = vsel %vm81, %v70, 0
  %v101 = vsel %vm81, %v71, 0
  %v104 = vsel %vm81, %v72, 0
  %vm106 = vcmask 1041408
  %v108 = vsel %vm106, %v73, 0
  %110 = vmatprep.subr.bf16.mxu0 0
  %111 = vmatpush1.bf16.msra.mxu0 %v108
  %112 = vmatprep.subr.bf16.mxu0 0
  %113 = vmatpush1.bf16.msra.mxu0 0
  %114 = vmatprep.subr.bf16.mxu0 0
  %115 = vmatpush1.bf16.msra.mxu0 0
  %116 = vmatprep.subr.bf16.mxu0 0
  %117 = vmatpush1.bf16.msra.mxu0 0
  %118 = vmatprep.subr.bf16.mxu0 0
  %119 = vmatpush1.bf16.msra.mxu0 0
  %120 = vmatprep.subr.bf16.mxu0 0
  %121 = vmatpush1.bf16.msra.mxu0 0
  %122 = vmatprep.subr.bf16.mxu0 0
  %123 = vmatpush1.bf16.msra.mxu0 0
  %124 = vmatprep.subr.bf16.mxu0 0
  %125 = vmatpush1.bf16.msra.mxu0 0
  %126 = vmatprep.subr.bf16.mxu0 0
  %127 = vmatpush1.bf16.msra.mxu0 0
  %128 = vmatprep.subr.bf16.mxu0 0
  %129 = vmatpush1.bf16.msra.mxu0 0
  %130 = vmatprep.subr.bf16.mxu0 0
  %131 = vmatpush1.bf16.msra.mxu0 0
  %132 = vmatprep.subr.bf16.mxu0 0
  %133 = vmatpush1.bf16.msra.mxu0 0
  %134 = vmatprep.subr.bf16.mxu0 0
  %135 = vmatpush1.bf16.msra.mxu0 0
  %136 = vmatprep.subr.bf16.mxu0 0
  %137 = vmatpush1.bf16.msra.mxu0 0
  %138 = vmatprep.subr.bf16.mxu0 0
  %139 = vmatpush1.bf16.msra.mxu0 0
  %140 = vmatprep.subr.bf16.mxu0 0
  %141 = vmatpush1.bf16.msra.mxu0 0
  %142 = vmatprep.mubr.bf16.mxu0 0
  %143 = vmatmul.mubr.bf16.gmra.mrb[0].mxu0 %v83
  %v144 = vpop.f32.mrb[0].mxu0
  %v145 = vadd.f32 %v79, %v144
  %v146 = vpop.f32.mrb[0].mxu0
  %v147 = vpop.f32.mrb[0].mxu0
  %v148 = vadd.f32 %v79, %v147
  %v149 = vpop.f32.mrb[0].mxu0
  %150 = vmatprep.mubr.bf16.mxu0 0
  %151 = vmatmul.mubr.bf16.gmra.mrb[0].mxu0 %v86
  %v152 = vpop.f32.mrb[0].mxu0
  %v153 = vadd.f32 %v79, %v152
  %v154 = vpop.f32.mrb[0].mxu0
  %v155 = vpop.f32.mrb[0].mxu0
  %v156 = vadd.f32 %v79, %v155
  %v157 = vpop.f32.mrb[0].mxu0
  %158 = vmatprep.mubr.bf16.mxu0 0
  %159 = vmatmul.mubr.bf16.gmra.mrb[0].mxu0 %v89
  %v160 = vpop.f32.mrb[0].mxu0
  %v161 = vadd.f32 %v79, %v160
  %v162 = vpop.f32.mrb[0].mxu0
  %v163 = vpop.f32.mrb[0].mxu0
  %v164 = vadd.f32 %v79, %v163
  %v165 = vpop.f32.mrb[0].mxu0
  %166 = vmatprep.mubr.bf16.mxu0 0
  %167 = vmatmul.mubr.bf16.gmra.mrb[0].mxu0 %v92
  %v168 = vpop.f32.mrb[0].mxu0
  %v169 = vadd.f32 %v79, %v168
  %v170 = vpop.f32.mrb[0].mxu0
  %v171 = vpop.f32.mrb[0].mxu0
  %v172 = vadd.f32 %v79, %v171
  %v173 = vpop.f32.mrb[0].mxu0
  %174 = vmatprep.mubr.bf16.mxu0 0
  %175 = vmatmul.mubr.bf16.gmra.mrb[0].mxu0 %v95
  %v176 = vpop.f32.mrb[0].mxu0
  %v177 = vadd.f32 %v79, %v176
  %v178 = vpop.f32.mrb[0].mxu0
  %v179 = vpop.f32.mrb[0].mxu0
  %v180 = vadd.f32 %v79, %v179
  %v181 = vpop.f32.mrb[0].mxu0
  %182 = vmatprep.mubr.bf16.mxu0 0
  %183 = vmatmul.mubr.bf16.gmra.mrb[0].mxu0 %v98
  %v184 = vpop.f32.mrb[0].mxu0
  %v185 = vadd.f32 %v79, %v184
  %v186 = vpop.f32.mrb[0].mxu0
  %v187 = vpop.f32.mrb[0].mxu0
  %v188 = vadd.f32 %v79, %v187
  %v189 = vpop.f32.mrb[0].mxu0
  %190 = vmatprep.mubr.bf16.mxu0 0
  %191 = vmatmul.mubr.bf16.gmra.mrb[0].mxu0 %v101
  %v192 = vpop.f32.mrb[0].mxu0
  %v193 = vadd.f32 %v79, %v192
  %v194 = vpop.f32.mrb[0].mxu0
  %v195 = vpop.f32.mrb[0].mxu0
  %v196 = vadd.f32 %v79, %v195
  %v197 = vpop.f32.mrb[0].mxu0
  %198 = vmatprep.mubr.bf16.mxu0 0
  %199 = vmatmul.mubr.bf16.gmra.mrb[0].mxu0 %v104
  %v200 = vpop.f32.mrb[0].mxu0
  %v201 = vadd.f32 %v79, %v200
  %v202 = vpop.f32.mrb[0].mxu0
  %v203 = vpop.f32.mrb[0].mxu0
  %v204 = vadd.f32 %v79, %v203
  %v205 = vpop.f32.mrb[0].mxu0
  %206 = vdwg.mxu0
  %207 = vst [vmem:[#allocation2] sm:$0xff] %v145
  %208 = vst [vmem:[#allocation2 + $0x8] sm:$0xff] %v148
  %209 = vst [vmem:[#allocation2 + $0x10] sm:$0xff] %v153
  %210 = vst [vmem:[#allocation2 + $0x18] sm:$0xff] %v156
  %211 = vst [vmem:[#allocation2 + $0x20] sm:$0xff] %v161
  %212 = vst [vmem:[#allocation2 + $0x28] sm:$0xff] %v164
  %213 = vst [vmem:[#allocation2 + $0x30] sm:$0xff] %v169
  %214 = vst [vmem:[#allocation2 + $0x38] sm:$0xff] %v172
  %215 = vst [vmem:[#allocation2 + $0x40] sm:$0xff] %v177
  %216 = vst [vmem:[#allocation2 + $0x48] sm:$0xff] %v180
  %217 = vst [vmem:[#allocation2 + $0x50] sm:$0xff] %v185
  %218 = vst [vmem:[#allocation2 + $0x58] sm:$0xff] %v188
  %219 = vst [vmem:[#allocation2 + $0x60] sm:$0xff] %v193
  %220 = vst [vmem:[#allocation2 + $0x68] sm:$0xff] %v196
  %221 = vst [vmem:[#allocation2 + $0x70] sm:$0xff] %v201
  %222 = vst [vmem:[#allocation2 + $0x78] sm:$0xff] %v204
  %v223 = vld [vmem:[%s2] sm:$0xf]
  %v224 = vld [vmem:[%s2 + $0x4] sm:$0xf]
  %v225 = vld [vmem:[%s2 + $0x8] sm:$0xf]
  %v226 = vld [vmem:[%s2 + $0xc] sm:$0xf]
  %v227 = vld [vmem:[%s4] sm:$0xff]
  %v228 = vld [vmem:[%s5] sm:$0xff]
  %v229 = vld [vmem:[#allocation2] sm:$0xff]
  %v230 = vpack.c.bf16 %v227, %v227
  %v235 = vunpack.c.l.b16 %v223
  %v236 = vunpack.c.l.b16 %v224
  %v237 = vunpack.c.l.b16 %v225
  %v238 = vunpack.c.l.b16 %v226
  %v239 = vpack.c.b16 %v236, %v235
  %v240 = vpack.c.b16 %v238, %v237
  %vm243 = vcmask 261120
  %v245 = vsel %vm243, %v230, 0
  %247 = vmatprep.subr.bf16.mxu0 0
  %248 = vmatpush1.bf16.msra.mxu0 %v239
  %249 = vmatprep.subr.bf16.mxu0 0
  %250 = vmatpush1.bf16.msra.mxu0 %v240
  %251 = vmatprep.subr.bf16.mxu0 0
  %252 = vmatpush1.bf16.msra.mxu0 0
  %253 = vmatprep.subr.bf16.mxu0 0
  %254 = vmatpush1.bf16.msra.mxu0 0
  %255 = vmatprep.subr.bf16.mxu0 0
  %256 = vmatpush1.bf16.msra.mxu0 0
  %257 = vmatprep.subr.bf16.mxu0 0
  %258 = vmatpush1.bf16.msra.mxu0 0
  %259 = vmatprep.subr.bf16.mxu0 0
  %260 = vmatpush1.bf16.msra.mxu0 0
  %261 = vmatprep.subr.bf16.mxu0 0
  %262 = vmatpush1.bf16.msra.mxu0 0
  %263 = vmatprep.subr.bf16.mxu0 0
  %264 = vmatpush1.bf16.msra.mxu0 0
  %265 = vmatprep.subr.bf16.mxu0 0
  %266 = vmatpush1.bf16.msra.mxu0 0
  %267 = vmatprep.subr.bf16.mxu0 0
  %268 = vmatpush1.bf16.msra.mxu0 0
  %269 = vmatprep.subr.bf16.mxu0 0
  %270 = vmatpush1.bf16.msra.mxu0 0
  %271 = vmatprep.subr.bf16.mxu0 0
  %272 = vmatpush1.bf16.msra.mxu0 0
  %273 = vmatprep.subr.bf16.mxu0 0
  %274 = vmatpush1.bf16.msra.mxu0 0
  %275 = vmatprep.subr.bf16.mxu0 0
  %276 = vmatpush1.bf16.msra.mxu0 0
  %277 = vmatprep.subr.bf16.mxu0 0
  %278 = vmatpush1.bf16.msra.mxu0 0
  %279 = vmatprep.mubr.bf16.mxu0 0
  %280 = vmatmul.mubr.bf16.gmra.mrb[0].mxu0 %v245
  %v281 = vpop.f32.mrb[0].mxu0
  %v282 = vadd.f32 0.0, %v281
  %v283 = vpop.f32.mrb[0].mxu0
  %v284 = vpop.f32.mrb[0].mxu0
  %v285 = vpop.f32.mrb[0].mxu0
  %286 = vdwg.mxu0
  %v287 = vadd.f32 %v229, %v282
  %v288 = vtanh.pop %v287
  %v289 = vadd.f32 %v288, 1.0
  %v290 = vmul.f32 %v289, 0.5
  %292 = vrot.lane.b32.xlu0 %v228, 32
  %v293 = vpop.permute.xlu0 %292
  %v295 = vmul.f32 %v290, %v293
  %297 = vrot.lane.b32.xlu0 %v288, 64
  %v298 = vpop.permute.xlu0 %297
  %v300 = vmul.f32 %v290, %v298
  %302 = vrot.lane.b32.xlu0 %v300, 32
  %v303 = vpop.permute.xlu0 %302
  %v305 = vadd.f32 %v295, %v303
  %v306 = vtanh.pop %v305
  %308 = vrot.lane.b32.xlu0 %v306, 64
  %v309 = vpop.permute.xlu0 %308
  %v311 = vmul.f32 %v290, %v309
  %313 = vrot.lane.b32.xlu0 %v311, 32
  %v314 = vpop.permute.xlu0 %313
  %316 = vst.msk [vmem:[#allocation3] sm:$0xff] %vm243, %v314
  %v317 = vld [vmem:[#allocation2 + $0x8] sm:$0xff]
  %v318 = vpack.c.bf16 %v311, %v311
  %320 = vrot.lane.b32.xlu0 %v318, 32
  %v321 = vpop.permute.xlu0 %320
  %v323 = vsel %vm243, %v321, 0
  %325 = vmatprep.subr.bf16.mxu0 0
  %326 = vmatpush1.bf16.msra.mxu0 %v239
  %327 = vmatprep.subr.bf16.mxu0 0
  %328 = vmatpush1.bf16.msra.mxu0 %v240
  %329 = vmatprep.subr.bf16.mxu0 0
  %330 = vmatpush1.bf16.msra.mxu0 0
  %331 = vmatprep.subr.bf16.mxu0 0
  %332 = vmatpush1.bf16.msra.mxu0 0
  %333 = vmatprep.subr.bf16.mxu0 0
  %334 = vmatpush1.bf16.msra.mxu0 0
  %335 = vmatprep.subr.bf16.mxu0 0
  %336 = vmatpush1.bf16.msra.mxu0 0
  %337 = vmatprep.subr.bf16.mxu0 0
  %338 = vmatpush1.bf16.msra.mxu0 0
  %339 = vmatprep.subr.bf16.mxu0 0
  %340 = vmatpush1.bf16.msra.mxu0 0
  %341 = vmatprep.subr.bf16.mxu0 0
  %342 = vmatpush1.bf16.msra.mxu0 0
  %343 = vmatprep.subr.bf16.mxu0 0
  %344 = vmatpush1.bf16.msra.mxu0 0
  %345 = vmatprep.subr.bf16.mxu0 0
  %346 = vmatpush1.bf16.msra.mxu0 0
  %347 = vmatprep.subr.bf16.mxu0 0
  %348 = vmatpush1.bf16.msra.mxu0 0
  %349 = vmatprep.subr.bf16.mxu0 0
  %350 = vmatpush1.bf16.msra.mxu0 0
  %351 = vmatprep.subr.bf16.mxu0 0
  %352 = vmatpush1.bf16.msra.mxu0 0
  %353 = vmatprep.subr.bf16.mxu0 0
  %354 = vmatpush1.bf16.msra.mxu0 0
  %355 = vmatprep.subr.bf16.mxu0 0
  %356 = vmatpush1.bf16.msra.mxu0 0
  %357 = vmatprep.mubr.bf16.mxu0 0
  %358 = vmatmul.mubr.bf16.gmra.mrb[0].mxu0 %v323
  %v359 = vpop.f32.mrb[0].mxu0
  %v360 = vadd.f32 0.0, %v359
  %v361 = vpop.f32.mrb[0].mxu0
  %v362 = vpop.f32.mrb[0].mxu0
  %v363 = vpop.f32.mrb[0].mxu0
  %364 = vdwg.mxu0
  %v365 = vadd.f32 %v317, %v360
  %v366 = vtanh.pop %v365
  %v367 = vadd.f32 %v366, 1.0
  %v368 = vmul.f32 %v367, 0.5
  %v369 = vmul.f32 %v368, %v305
  %371 = vrot.lane.b32.xlu0 %v366, 64
  %v372 = vpop.permute.xlu0 %371
  %v374 = vmul.f32 %v368, %v372
  %376 = vrot.lane.b32.xlu0 %v374, 32
  %v377 = vpop.permute.xlu0 %376
  %v379 = vadd.f32 %v369, %v377
  %v380 = vtanh.pop %v379
  %382 = vrot.lane.b32.xlu0 %v380, 64
  %v383 = vpop.permute.xlu0 %382
  %v385 = vmul.f32 %v368, %v383
  %387 = vrot.lane.b32.xlu0 %v385, 32
  %v388 = vpop.permute.xlu0 %387
  %390 = vst.msk [vmem:[#allocation3 + $0x8] sm:$0xff] %vm243, %v388
  %v391 = vld [vmem:[#allocation2 + $0x10] sm:$0xff]
  %v392 = vpack.c.bf16 %v385, %v385
  %394 = vrot.lane.b32.xlu0 %v392, 32
  %v395 = vpop.permute.xlu0 %394
  %v397 = vsel %vm243, %v395, 0
  %399 = vmatprep.subr.bf16.mxu0 0
  %400 = vmatpush1.bf16.msra.mxu0 %v239
  %401 = vmatprep.subr.bf16.mxu0 0
  %402 = vmatpush1.bf16.msra.mxu0 %v240
  %403 = vmatprep.subr.bf16.mxu0 0
  %404 = vmatpush1.bf16.msra.mxu0 0
  %405 = vmatprep.subr.bf16.mxu0 0
  %406 = vmatpush1.bf16.msra.mxu0 0
  %407 = vmatprep.subr.bf16.mxu0 0
  %408 = vmatpush1.bf16.msra.mxu0 0
  %409 = vmatprep.subr.bf16.mxu0 0
  %410 = vmatpush1.bf16.msra.mxu0 0
  %411 = vmatprep.subr.bf16.mxu0 0
  %412 = vmatpush1.bf16.msra.mxu0 0
  %413 = vmatprep.subr.bf16.mxu0 0
  %414 = vmatpush1.bf16.msra.mxu0 0
  %415 = vmatprep.subr.bf16.mxu0 0
  %416 = vmatpush1.bf16.msra.mxu0 0
  %417 = vmatprep.subr.bf16.mxu0 0
  %418 = vmatpush1.bf16.msra.mxu0 0
  %419 = vmatprep.subr.bf16.mxu0 0
  %420 = vmatpush1.bf16.msra.mxu0 0
  %421 = vmatprep.subr.bf16.mxu0 0
  %422 = vmatpush1.bf16.msra.mxu0 0
  %423 = vmatprep.subr.bf16.mxu0 0
  %424 = vmatpush1.bf16.msra.mxu0 0
  %425 = vmatprep.subr.bf16.mxu0 0
  %426 = vmatpush1.bf16.msra.mxu0 0
  %427 = vmatprep.subr.bf16.mxu0 0
  %428 = vmatpush1.bf16.msra.mxu0 0
  %429 = vmatprep.subr.bf16.mxu0 0
  %430 = vmatpush1.bf16.msra.mxu0 0
  %431 = vmatprep.mubr.bf16.mxu0 0
  %432 = vmatmul.mubr.bf16.gmra.mrb[0].mxu0 %v397
  %v433 = vpop.f32.mrb[0].mxu0
  %v434 = vadd.f32 0.0, %v433
  %v435 = vpop.f32.mrb[0].mxu0
  %v436 = vpop.f32.mrb[0].mxu0
  %v437 = vpop.f32.mrb[0].mxu0
  %438 = vdwg.mxu0
  %v439 = vadd.f32 %v391, %v434
  %v440 = vtanh.pop %v439
  %v441 = vadd.f32 %v440, 1.0
  %v442 = vmul.f32 %v441, 0.5
  %v443 = vmul.f32 %v442, %v379
  %445 = vrot.lane.b32.xlu0 %v440, 64
  %v446 = vpop.permute.xlu0 %445
  %v448 = vmul.f32 %v442, %v446
  %450 = vrot.lane.b32.xlu0 %v448, 32
  %v451 = vpop.permute.xlu0 %450
  %v453 = vadd.f32 %v443, %v451
  %v454 = vtanh.pop %v453
  %456 = vrot.lane.b32.xlu0 %v454, 64
  %v457 = vpop.permute.xlu0 %456
  %v459 = vmul.f32 %v442, %v457
  %461 = vrot.lane.b32.xlu0 %v459, 32
  %v462 = vpop.permute.xlu0 %461
  %464 = vst.msk [vmem:[#allocation3 + $0x10] sm:$0xff] %vm243, %v462
  %v465 = vld [vmem:[#allocation2 + $0x18] sm:$0xff]
  %v466 = vpack.c.bf16 %v459, %v459
  %468 = vrot.lane.b32.xlu0 %v466, 32
  %v469 = vpop.permute.xlu0 %468
  %v471 = vsel %vm243, %v469, 0
  %473 = vmatprep.subr.bf16.mxu0 0
  %474 = vmatpush1.bf16.msra.mxu0 %v239
  %475 = vmatprep.subr.bf16.mxu0 0
  %476 = vmatpush1.bf16.msra.mxu0 %v240
  %477 = vmatprep.subr.bf16.mxu0 0
  %478 = vmatpush1.bf16.msra.mxu0 0
  %479 = vmatprep.subr.bf16.mxu0 0
  %480 = vmatpush1.bf16.msra.mxu0 0
  %481 = vmatprep.subr.bf16.mxu0 0
  %482 = vmatpush1.bf16.msra.mxu0 0
  %483 = vmatprep.subr.bf16.mxu0 0
  %484 = vmatpush1.bf16.msra.mxu0 0
  %485 = vmatprep.subr.bf16.mxu0 0
  %486 = vmatpush1.bf16.msra.mxu0 0
  %487 = vmatprep.subr.bf16.mxu0 0
  %488 = vmatpush1.bf16.msra.mxu0 0
  %489 = vmatprep.subr.bf16.mxu0 0
  %490 = vmatpush1.bf16.msra.mxu0 0
  %491 = vmatprep.subr.bf16.mxu0 0
  %492 = vmatpush1.bf16.msra.mxu0 0
  %493 = vmatprep.subr.bf16.mxu0 0
  %494 = vmatpush1.bf16.msra.mxu0 0
  %495 = vmatprep.subr.bf16.mxu0 0
  %496 = vmatpush1.bf16.msra.mxu0 0
  %497 = vmatprep.subr.bf16.mxu0 0
  %498 = vmatpush1.bf16.msra.mxu0 0
  %499 = vmatprep.subr.bf16.mxu0 0
  %500 = vmatpush1.bf16.msra.mxu0 0
  %501 = vmatprep.subr.bf16.mxu0 0
  %502 = vmatpush1.bf16.msra.mxu0 0
  %503 = vmatprep.subr.bf16.mxu0 0
  %504 = vmatpush1.bf16.msra.mxu0 0
  %505 = vmatprep.mubr.bf16.mxu0 0
  %506 = vmatmul.mubr.bf16.gmra.mrb[0].mxu0 %v471
  %v507 = vpop.f32.mrb[0].mxu0
  %v508 = vadd.f32 0.0, %v507
  %v509 = vpop.f32.mrb[0].mxu0
  %v510 = vpop.f32.mrb[0].mxu0
  %v511 = vpop.f32.mrb[0].mxu0
  %512 = vdwg.mxu0
  %v513 = vadd.f32 %v465, %v508
  %v514 = vtanh.pop %v513
  %v515 = vadd.f32 %v514, 1.0
  %v516 = vmul.f32 %v515, 0.5
  %v517 = vmul.f32 %v516, %v453
  %519 = vrot.lane.b32.xlu0 %v514, 64
  %v520 = vpop.permute.xlu0 %519
  %v522 = vmul.f32 %v516, %v520
  %524 = vrot.lane.b32.xlu0 %v522, 32
  %v525 = vpop.permute.xlu0 %524
  %v527 = vadd.f32 %v517, %v525
  %v528 = vtanh.pop %v527
  %530 = vrot.lane.b32.xlu0 %v528, 64
  %v531 = vpop.permute.xlu0 %530
  %v533 = vmul.f32 %v516, %v531
  %535 = vrot.lane.b32.xlu0 %v533, 32
  %v536 = vpop.permute.xlu0 %535
  %538 = vst.msk [vmem:[#allocation3 + $0x18] sm:$0xff] %vm243, %v536
  %v539 = vld [vmem:[#allocation2 + $0x20] sm:$0xff]
  %v540 = vpack.c.bf16 %v533, %v533
  %542 = vrot.lane.b32.xlu0 %v540, 32
  %v543 = vpop.permute.xlu0 %542
  %v545 = vsel %vm243, %v543, 0
  %547 = vmatprep.subr.bf16.mxu0 0
  %548 = vmatpush1.bf16.msra.mxu0 %v239
  %549 = vmatprep.subr.bf16.mxu0 0
  %550 = vmatpush1.bf16.msra.mxu0 %v240
  %551 = vmatprep.subr.bf16.mxu0 0
  %552 = vmatpush1.bf16.msra.mxu0 0
  %553 = vmatprep.subr.bf16.mxu0 0
  %554 = vmatpush1.bf16.msra.mxu0 0
  %555 = vmatprep.subr.bf16.mxu0 0
  %556 = vmatpush1.bf16.msra.mxu0 0
  %557 = vmatprep.subr.bf16.mxu0 0
  %558 = vmatpush1.bf16.msra.mxu0 0
  %559 = vmatprep.subr.bf16.mxu0 0
  %560 = vmatpush1.bf16.msra.mxu0 0
  %561 = vmatprep.subr.bf16.mxu0 0
  %562 = vmatpush1.bf16.msra.mxu0 0
  %563 = vmatprep.subr.bf16.mxu0 0
  %564 = vmatpush1.bf16.msra.mxu0 0
  %565 = vmatprep.subr.bf16.mxu0 0
  %566 = vmatpush1.bf16.msra.mxu0 0
  %567 = vmatprep.subr.bf16.mxu0 0
  %568 = vmatpush1.bf16.msra.mxu0 0
  %569 = vmatprep.subr.bf16.mxu0 0
  %570 = vmatpush1.bf16.msra.mxu0 0
  %571 = vmatprep.subr.bf16.mxu0 0
  %572 = vmatpush1.bf16.msra.mxu0 0
  %573 = vmatprep.subr.bf16.mxu0 0
  %574 = vmatpush1.bf16.msra.mxu0 0
  %575 = vmatprep.subr.bf16.mxu0 0
  %576 = vmatpush1.bf16.msra.mxu0 0
  %577 = vmatprep.subr.bf16.mxu0 0
  %578 = vmatpush1.bf16.msra.mxu0 0
  %579 = vmatprep.mubr.bf16.mxu0 0
  %580 = vmatmul.mubr.bf16.gmra.mrb[0].mxu0 %v545
  %v581 = vpop.f32.mrb[0].mxu0
  %v582 = vadd.f32 0.0, %v581
  %v583 = vpop.f32.mrb[0].mxu0
  %v584 = vpop.f32.mrb[0].mxu0
  %v585 = vpop.f32.mrb[0].mxu0
  %586 = vdwg.mxu0
  %v587 = vadd.f32 %v539, %v582
  %v588 = vtanh.pop %v587
  %v589 = vadd.f32 %v588, 1.0
  %v590 = vmul.f32 %v589, 0.5
  %v591 = vmul.f32 %v590, %v527
  %593 = vrot.lane.b32.xlu0 %v588, 64
  %v594 = vpop.permute.xlu0 %593
  %v596 = vmul.f32 %v590, %v594
  %598 = vrot.lane.b32.xlu0 %v596, 32
  %v599 = vpop.permute.xlu0 %598
  %v601 = vadd.f32 %v591, %v599
  %v602 = vtanh.pop %v601
  %604 = vrot.lane.b32.xlu0 %v602, 64
  %v605 = vpop.permute.xlu0 %604
  %v607 = vmul.f32 %v590, %v605
  %609 = vrot.lane.b32.xlu0 %v607, 32
  %v610 = vpop.permute.xlu0 %609
  %612 = vst.msk [vmem:[#allocation3 + $0x20] sm:$0xff] %vm243, %v610
  %v613 = vld [vmem:[#allocation2 + $0x28] sm:$0xff]
  %v614 = vpack.c.bf16 %v607, %v607
  %616 = vrot.lane.b32.xlu0 %v614, 32
  %v617 = vpop.permute.xlu0 %616
  %v619 = vsel %vm243, %v617, 0
  %621 = vmatprep.subr.bf16.mxu0 0
  %622 = vmatpush1.bf16.msra.mxu0 %v239
  %623 = vmatprep.subr.bf16.mxu0 0
  %624 = vmatpush1.bf16.msra.mxu0 %v240
  %625 = vmatprep.subr.bf16.mxu0 0
  %626 = vmatpush1.bf16.msra.mxu0 0
  %627 = vmatprep.subr.bf16.mxu0 0
  %628 = vmatpush1.bf16.msra.mxu0 0
  %629 = vmatprep.subr.bf16.mxu0 0
  %630 = vmatpush1.bf16.msra.mxu0 0
  %631 = vmatprep.subr.bf16.mxu0 0
  %632 = vmatpush1.bf16.msra.mxu0 0
  %633 = vmatprep.subr.bf16.mxu0 0
  %634 = vmatpush1.bf16.msra.mxu0 0
  %635 = vmatprep.subr.bf16.mxu0 0
  %636 = vmatpush1.bf16.msra.mxu0 0
  %637 = vmatprep.subr.bf16.mxu0 0
  %638 = vmatpush1.bf16.msra.mxu0 0
  %639 = vmatprep.subr.bf16.mxu0 0
  %640 = vmatpush1.bf16.msra.mxu0 0
  %641 = vmatprep.subr.bf16.mxu0 0
  %642 = vmatpush1.bf16.msra.mxu0 0
  %643 = vmatprep.subr.bf16.mxu0 0
  %644 = vmatpush1.bf16.msra.mxu0 0
  %645 = vmatprep.subr.bf16.mxu0 0
  %646 = vmatpush1.bf16.msra.mxu0 0
  %647 = vmatprep.subr.bf16.mxu0 0
  %648 = vmatpush1.bf16.msra.mxu0 0
  %649 = vmatprep.subr.bf16.mxu0 0
  %650 = vmatpush1.bf16.msra.mxu0 0
  %651 = vmatprep.subr.bf16.mxu0 0
  %652 = vmatpush1.bf16.msra.mxu0 0
  %653 = vmatprep.mubr.bf16.mxu0 0
  %654 = vmatmul.mubr.bf16.gmra.mrb[0].mxu0 %v619
  %v655 = vpop.f32.mrb[0].mxu0
  %v656 = vadd.f32 0.0, %v655
  %v657 = vpop.f32.mrb[0].mxu0
  %v658 = vpop.f32.mrb[0].mxu0
  %v659 = vpop.f32.mrb[0].mxu0
  %660 = vdwg.mxu0
  %v661 = vadd.f32 %v613, %v656
  %v662 = vtanh.pop %v661
  %v663 = vadd.f32 %v662, 1.0
  %v664 = vmul.f32 %v663, 0.5
  %v665 = vmul.f32 %v664, %v601
  %667 = vrot.lane.b32.xlu0 %v662, 64
  %v668 = vpop.permute.xlu0 %667
  %v670 = vmul.f32 %v664, %v668
  %672 = vrot.lane.b32.xlu0 %v670, 32
  %v673 = vpop.permute.xlu0 %672
  %v675 = vadd.f32 %v665, %v673
  %v676 = vtanh.pop %v675
  %678 = vrot.lane.b32.xlu0 %v676, 64
  %v679 = vpop.permute.xlu0 %678
  %v681 = vmul.f32 %v664, %v679
  %683 = vrot.lane.b32.xlu0 %v681, 32
  %v684 = vpop.permute.xlu0 %683
  %686 = vst.msk [vmem:[#allocation3 + $0x28] sm:$0xff] %vm243, %v684
  %v687 = vld [vmem:[#allocation2 + $0x30] sm:$0xff]
  %v688 = vpack.c.bf16 %v681, %v681
  %690 = vrot.lane.b32.xlu0 %v688, 32
  %v691 = vpop.permute.xlu0 %690
  %v693 = vsel %vm243, %v691, 0
  %695 = vmatprep.subr.bf16.mxu0 0
  %696 = vmatpush1.bf16.msra.mxu0 %v239
  %697 = vmatprep.subr.bf16.mxu0 0
  %698 = vmatpush1.bf16.msra.mxu0 %v240
  %699 = vmatprep.subr.bf16.mxu0 0
  %700 = vmatpush1.bf16.msra.mxu0 0
  %701 = vmatprep.subr.bf16.mxu0 0
  %702 = vmatpush1.bf16.msra.mxu0 0
  %703 = vmatprep.subr.bf16.mxu0 0
  %704 = vmatpush1.bf16.msra.mxu0 0
  %705 = vmatprep.subr.bf16.mxu0 0
  %706 = vmatpush1.bf16.msra.mxu0 0
  %707 = vmatprep.subr.bf16.mxu0 0
  %708 = vmatpush1.bf16.msra.mxu0 0
  %709 = vmatprep.subr.bf16.mxu0 0
  %710 = vmatpush1.bf16.msra.mxu0 0
  %711 = vmatprep.subr.bf16.mxu0 0
  %712 = vmatpush1.bf16.msra.mxu0 0
  %713 = vmatprep.subr.bf16.mxu0 0
  %714 = vmatpush1.bf16.msra.mxu0 0
  %715 = vmatprep.subr.bf16.mxu0 0
  %716 = vmatpush1.bf16.msra.mxu0 0
  %717 = vmatprep.subr.bf16.mxu0 0
  %718 = vmatpush1.bf16.msra.mxu0 0
  %719 = vmatprep.subr.bf16.mxu0 0
  %720 = vmatpush1.bf16.msra.mxu0 0
  %721 = vmatprep.subr.bf16.mxu0 0
  %722 = vmatpush1.bf16.msra.mxu0 0
  %723 = vmatprep.subr.bf16.mxu0 0
  %724 = vmatpush1.bf16.msra.mxu0 0
  %725 = vmatprep.subr.bf16.mxu0 0
  %726 = vmatpush1.bf16.msra.mxu0 0
  %727 = vmatprep.mubr.bf16.mxu0 0
  %728 = vmatmul.mubr.bf16.gmra.mrb[0].mxu0 %v693
  %v729 = vpop.f32.mrb[0].mxu0
  %v730 = vadd.f32 0.0, %v729
  %v731 = vpop.f32.mrb[0].mxu0
  %v732 = vpop.f32.mrb[0].mxu0
  %v733 = vpop.f32.mrb[0].mxu0
  %734 = vdwg.mxu0
  %v735 = vadd.f32 %v687, %v730
  %v736 = vtanh.pop %v735
  %v737 = vadd.f32 %v736, 1.0
  %v738 = vmul.f32 %v737, 0.5
  %v739 = vmul.f32 %v738, %v675
  %741 = vrot.lane.b32.xlu0 %v736, 64
  %v742 = vpop.permute.xlu0 %741
  %v744 = vmul.f32 %v738, %v742
  %746 = vrot.lane.b32.xlu0 %v744, 32
  %v747 = vpop.permute.xlu0 %746
  %v749 = vadd.f32 %v739, %v747
  %v750 = vtanh.pop %v749
  %752 = vrot.lane.b32.xlu0 %v750, 64
  %v753 = vpop.permute.xlu0 %752
  %v755 = vmul.f32 %v738, %v753
  %757 = vrot.lane.b32.xlu0 %v755, 32
  %v758 = vpop.permute.xlu0 %757
  %760 = vst.msk [vmem:[#allocation3 + $0x30] sm:$0xff] %vm243, %v758
  %v761 = vld [vmem:[#allocation2 + $0x38] sm:$0xff]
  %v762 = vpack.c.bf16 %v755, %v755
  %764 = vrot.lane.b32.xlu0 %v762, 32
  %v765 = vpop.permute.xlu0 %764
  %v767 = vsel %vm243, %v765, 0
  %769 = vmatprep.subr.bf16.mxu0 0
  %770 = vmatpush1.bf16.msra.mxu0 %v239
  %771 = vmatprep.subr.bf16.mxu0 0
  %772 = vmatpush1.bf16.msra.mxu0 %v240
  %773 = vmatprep.subr.bf16.mxu0 0
  %774 = vmatpush1.bf16.msra.mxu0 0
  %775 = vmatprep.subr.bf16.mxu0 0
  %776 = vmatpush1.bf16.msra.mxu0 0
  %777 = vmatprep.subr.bf16.mxu0 0
  %778 = vmatpush1.bf16.msra.mxu0 0
  %779 = vmatprep.subr.bf16.mxu0 0
  %780 = vmatpush1.bf16.msra.mxu0 0
  %781 = vmatprep.subr.bf16.mxu0 0
  %782 = vmatpush1.bf16.msra.mxu0 0
  %783 = vmatprep.subr.bf16.mxu0 0
  %784 = vmatpush1.bf16.msra.mxu0 0
  %785 = vmatprep.subr.bf16.mxu0 0
  %786 = vmatpush1.bf16.msra.mxu0 0
  %787 = vmatprep.subr.bf16.mxu0 0
  %788 = vmatpush1.bf16.msra.mxu0 0
  %789 = vmatprep.subr.bf16.mxu0 0
  %790 = vmatpush1.bf16.msra.mxu0 0
  %791 = vmatprep.subr.bf16.mxu0 0
  %792 = vmatpush1.bf16.msra.mxu0 0
  %793 = vmatprep.subr.bf16.mxu0 0
  %794 = vmatpush1.bf16.msra.mxu0 0
  %795 = vmatprep.subr.bf16.mxu0 0
  %796 = vmatpush1.bf16.msra.mxu0 0
  %797 = vmatprep.subr.bf16.mxu0 0
  %798 = vmatpush1.bf16.msra.mxu0 0
  %799 = vmatprep.subr.bf16.mxu0 0
  %800 = vmatpush1.bf16.msra.mxu0 0
  %801 = vmatprep.mubr.bf16.mxu0 0
  %802 = vmatmul.mubr.bf16.gmra.mrb[0].mxu0 %v767
  %v803 = vpop.f32.mrb[0].mxu0
  %v804 = vadd.f32 0.0, %v803
  %v805 = vpop.f32.mrb[0].mxu0
  %v806 = vpop.f32.mrb[0].mxu0
  %v807 = vpop.f32.mrb[0].mxu0
  %808 = vdwg.mxu0
  %v809 = vadd.f32 %v761, %v804
  %v810 = vtanh.pop %v809
  %v811 = vadd.f32 %v810, 1.0
  %v812 = vmul.f32 %v811, 0.5
  %v813 = vmul.f32 %v812, %v749
  %815 = vrot.lane.b32.xlu0 %v810, 64
  %v816 = vpop.permute.xlu0 %815
  %v818 = vmul.f32 %v812, %v816
  %820 = vrot.lane.b32.xlu0 %v818, 32
  %v821 = vpop.permute.xlu0 %820
  %v823 = vadd.f32 %v813, %v821
  %v824 = vtanh.pop %v823
  %826 = vrot.lane.b32.xlu0 %v824, 64
  %v827 = vpop.permute.xlu0 %826
  %v829 = vmul.f32 %v812, %v827
  %831 = vrot.lane.b32.xlu0 %v829, 32
  %v832 = vpop.permute.xlu0 %831
  %834 = vst.msk [vmem:[#allocation3 + $0x38] sm:$0xff] %vm243, %v832
  %v835 = vld [vmem:[#allocation2 + $0x40] sm:$0xff]
  %v836 = vpack.c.bf16 %v829, %v829
  %838 = vrot.lane.b32.xlu0 %v836, 32
  %v839 = vpop.permute.xlu0 %838
  %v841 = vsel %vm243, %v839, 0
  %843 = vmatprep.subr.bf16.mxu0 0
  %844 = vmatpush1.bf16.msra.mxu0 %v239
  %845 = vmatprep.subr.bf16.mxu0 0
  %846 = vmatpush1.bf16.msra.mxu0 %v240
  %847 = vmatprep.subr.bf16.mxu0 0
  %848 = vmatpush1.bf16.msra.mxu0 0
  %849 = vmatprep.subr.bf16.mxu0 0
  %850 = vmatpush1.bf16.msra.mxu0 0
  %851 = vmatprep.subr.bf16.mxu0 0
  %852 = vmatpush1.bf16.msra.mxu0 0
  %853 = vmatprep.subr.bf16.mxu0 0
  %854 = vmatpush1.bf16.msra.mxu0 0
  %855 = vmatprep.subr.bf16.mxu0 0
  %856 = vmatpush1.bf16.msra.mxu0 0
  %857 = vmatprep.subr.bf16.mxu0 0
  %858 = vmatpush1.bf16.msra.mxu0 0
  %859 = vmatprep.subr.bf16.mxu0 0
  %860 = vmatpush1.bf16.msra.mxu0 0
  %861 = vmatprep.subr.bf16.mxu0 0
  %862 = vmatpush1.bf16.msra.mxu0 0
  %863 = vmatprep.subr.bf16.mxu0 0
  %864 = vmatpush1.bf16.msra.mxu0 0
  %865 = vmatprep.subr.bf16.mxu0 0
  %866 = vmatpush1.bf16.msra.mxu0 0
  %867 = vmatprep.subr.bf16.mxu0 0
  %868 = vmatpush1.bf16.msra.mxu0 0
  %869 = vmatprep.subr.bf16.mxu0 0
  %870 = vmatpush1.bf16.msra.mxu0 0
  %871 = vmatprep.subr.bf16.mxu0 0
  %872 = vmatpush1.bf16.msra.mxu0 0
  %873 = vmatprep.subr.bf16.mxu0 0
  %874 = vmatpush1.bf16.msra.mxu0 0
  %875 = vmatprep.mubr.bf16.mxu0 0
  %876 = vmatmul.mubr.bf16.gmra.mrb[0].mxu0 %v841
  %v877 = vpop.f32.mrb[0].mxu0
  %v878 = vadd.f32 0.0, %v877
  %v879 = vpop.f32.mrb[0].mxu0
  %v880 = vpop.f32.mrb[0].mxu0
  %v881 = vpop.f32.mrb[0].mxu0
  %882 = vdwg.mxu0
  %v883 = vadd.f32 %v835, %v878
  %v884 = vtanh.pop %v883
  %v885 = vadd.f32 %v884, 1.0
  %v886 = vmul.f32 %v885, 0.5
  %v887 = vmul.f32 %v886, %v823
  %889 = vrot.lane.b32.xlu0 %v884, 64
  %v890 = vpop.permute.xlu0 %889
  %v892 = vmul.f32 %v886, %v890
  %894 = vrot.lane.b32.xlu0 %v892, 32
  %v895 = vpop.permute.xlu0 %894
  %v897 = vadd.f32 %v887, %v895
  %v898 = vtanh.pop %v897
  %900 = vrot.lane.b32.xlu0 %v898, 64
  %v901 = vpop.permute.xlu0 %900
  %v903 = vmul.f32 %v886, %v901
  %905 = vrot.lane.b32.xlu0 %v903, 32
  %v906 = vpop.permute.xlu0 %905
  %908 = vst.msk [vmem:[#allocation3 + $0x40] sm:$0xff] %vm243, %v906
  %v909 = vld [vmem:[#allocation2 + $0x48] sm:$0xff]
  %v910 = vpack.c.bf16 %v903, %v903
  %912 = vrot.lane.b32.xlu0 %v910, 32
  %v913 = vpop.permute.xlu0 %912
  %v915 = vsel %vm243, %v913, 0
  %917 = vmatprep.subr.bf16.mxu0 0
  %918 = vmatpush1.bf16.msra.mxu0 %v239
  %919 = vmatprep.subr.bf16.mxu0 0
  %920 = vmatpush1.bf16.msra.mxu0 %v240
  %921 = vmatprep.subr.bf16.mxu0 0
  %922 = vmatpush1.bf16.msra.mxu0 0
  %923 = vmatprep.subr.bf16.mxu0 0
  %924 = vmatpush1.bf16.msra.mxu0 0
  %925 = vmatprep.subr.bf16.mxu0 0
  %926 = vmatpush1.bf16.msra.mxu0 0
  %927 = vmatprep.subr.bf16.mxu0 0
  %928 = vmatpush1.bf16.msra.mxu0 0
  %929 = vmatprep.subr.bf16.mxu0 0
  %930 = vmatpush1.bf16.msra.mxu0 0
  %931 = vmatprep.subr.bf16.mxu0 0
  %932 = vmatpush1.bf16.msra.mxu0 0
  %933 = vmatprep.subr.bf16.mxu0 0
  %934 = vmatpush1.bf16.msra.mxu0 0
  %935 = vmatprep.subr.bf16.mxu0 0
  %936 = vmatpush1.bf16.msra.mxu0 0
  %937 = vmatprep.subr.bf16.mxu0 0
  %938 = vmatpush1.bf16.msra.mxu0 0
  %939 = vmatprep.subr.bf16.mxu0 0
  %940 = vmatpush1.bf16.msra.mxu0 0
  %941 = vmatprep.subr.bf16.mxu0 0
  %942 = vmatpush1.bf16.msra.mxu0 0
  %943 = vmatprep.subr.bf16.mxu0 0
  %944 = vmatpush1.bf16.msra.mxu0 0
  %945 = vmatprep.subr.bf16.mxu0 0
  %946 = vmatpush1.bf16.msra.mxu0 0
  %947 = vmatprep.subr.bf16.mxu0 0
  %948 = vmatpush1.bf16.msra.mxu0 0
  %949 = vmatprep.mubr.bf16.mxu0 0
  %950 = vmatmul.mubr.bf16.gmra.mrb[0].mxu0 %v915
  %v951 = vpop.f32.mrb[0].mxu0
  %v952 = vadd.f32 0.0, %v951
  %v953 = vpop.f32.mrb[0].mxu0
  %v954 = vpop.f32.mrb[0].mxu0
  %v955 = vpop.f32.mrb[0].mxu0
  %956 = vdwg.mxu0
  %v957 = vadd.f32 %v909, %v952
  %v958 = vtanh.pop %v957
  %v959 = vadd.f32 %v958, 1.0
  %v960 = vmul.f32 %v959, 0.5
  %v961 = vmul.f32 %v960, %v897
  %963 = vrot.lane.b32.xlu0 %v958, 64
  %v964 = vpop.permute.xlu0 %963
  %v966 = vmul.f32 %v960, %v964
  %968 = vrot.lane.b32.xlu0 %v966, 32
  %v969 = vpop.permute.xlu0 %968
  %v971 = vadd.f32 %v961, %v969
  %v972 = vtanh.pop %v971
  %974 = vrot.lane.b32.xlu0 %v972, 64
  %v975 = vpop.permute.xlu0 %974
  %v977 = vmul.f32 %v960, %v975
  %979 = vrot.lane.b32.xlu0 %v977, 32
  %v980 = vpop.permute.xlu0 %979
  %982 = vst.msk [vmem:[#allocation3 + $0x48] sm:$0xff] %vm243, %v980
  %v983 = vld [vmem:[#allocation2 + $0x50] sm:$0xff]
  %v984 = vpack.c.bf16 %v977, %v977
  %986 = vrot.lane.b32.xlu0 %v984, 32
  %v987 = vpop.permute.xlu0 %986
  %v989 = vsel %vm243, %v987, 0
  %991 = vmatprep.subr.bf16.mxu0 0
  %992 = vmatpush1.bf16.msra.mxu0 %v239
  %993 = vmatprep.subr.bf16.mxu0 0
  %994 = vmatpush1.bf16.msra.mxu0 %v240
  %995 = vmatprep.subr.bf16.mxu0 0
  %996 = vmatpush1.bf16.msra.mxu0 0
  %997 = vmatprep.subr.bf16.mxu0 0
  %998 = vmatpush1.bf16.msra.mxu0 0
  %999 = vmatprep.subr.bf16.mxu0 0
  %1000 = vmatpush1.bf16.msra.mxu0 0
  %1001 = vmatprep.subr.bf16.mxu0 0
  %1002 = vmatpush1.bf16.msra.mxu0 0
  %1003 = vmatprep.subr.bf16.mxu0 0
  %1004 = vmatpush1.bf16.msra.mxu0 0
  %1005 = vmatprep.subr.bf16.mxu0 0
  %1006 = vmatpush1.bf16.msra.mxu0 0
  %1007 = vmatprep.subr.bf16.mxu0 0
  %1008 = vmatpush1.bf16.msra.mxu0 0
  %1009 = vmatprep.subr.bf16.mxu0 0
  %1010 = vmatpush1.bf16.msra.mxu0 0
  %1011 = vmatprep.subr.bf16.mxu0 0
  %1012 = vmatpush1.bf16.msra.mxu0 0
  %1013 = vmatprep.subr.bf16.mxu0 0
  %1014 = vmatpush1.bf16.msra.mxu0 0
  %1015 = vmatprep.subr.bf16.mxu0 0
  %1016 = vmatpush1.bf16.msra.mxu0 0
  %1017 = vmatprep.subr.bf16.mxu0 0
  %1018 = vmatpush1.bf16.msra.mxu0 0
  %1019 = vmatprep.subr.bf16.mxu0 0
  %1020 = vmatpush1.bf16.msra.mxu0 0
  %1021 = vmatprep.subr.bf16.mxu0 0
  %1022 = vmatpush1.bf16.msra.mxu0 0
  %1023 = vmatprep.mubr.bf16.mxu0 0
  %1024 = vmatmul.mubr.bf16.gmra.mrb[0].mxu0 %v989
  %v1025 = vpop.f32.mrb[0].mxu0
  %v1026 = vadd.f32 0.0, %v1025
  %v1027 = vpop.f32.mrb[0].mxu0
  %v1028 = vpop.f32.mrb[0].mxu0
  %v1029 = vpop.f32.mrb[0].mxu0
  %1030 = vdwg.mxu0
  %v1031 = vadd.f32 %v983, %v1026
  %v1032 = vtanh.pop %v1031
  %v1033 = vadd.f32 %v1032, 1.0
  %v1034 = vmul.f32 %v1033, 0.5
  %v1035 = vmul.f32 %v1034, %v971
  %1037 = vrot.lane.b32.xlu0 %v1032, 64
  %v1038 = vpop.permute.xlu0 %1037
  %v1040 = vmul.f32 %v1034, %v1038
  %1042 = vrot.lane.b32.xlu0 %v1040, 32
  %v1043 = vpop.permute.xlu0 %1042
  %v1045 = vadd.f32 %v1035, %v1043
  %v1046 = vtanh.pop %v1045
  %1048 = vrot.lane.b32.xlu0 %v1046, 64
  %v1049 = vpop.permute.xlu0 %1048
  %v1051 = vmul.f32 %v1034, %v1049
  %1053 = vrot.lane.b32.xlu0 %v1051, 32
  %v1054 = vpop.permute.xlu0 %1053
  %1056 = vst.msk [vmem:[#allocation3 + $0x50] sm:$0xff] %vm243, %v1054
  %v1057 = vld [vmem:[#allocation2 + $0x58] sm:$0xff]
  %v1058 = vpack.c.bf16 %v1051, %v1051
  %1060 = vrot.lane.b32.xlu0 %v1058, 32
  %v1061 = vpop.permute.xlu0 %1060
  %v1063 = vsel %vm243, %v1061, 0
  %1065 = vmatprep.subr.bf16.mxu0 0
  %1066 = vmatpush1.bf16.msra.mxu0 %v239
  %1067 = vmatprep.subr.bf16.mxu0 0
  %1068 = vmatpush1.bf16.msra.mxu0 %v240
  %1069 = vmatprep.subr.bf16.mxu0 0
  %1070 = vmatpush1.bf16.msra.mxu0 0
  %1071 = vmatprep.subr.bf16.mxu0 0
  %1072 = vmatpush1.bf16.msra.mxu0 0
  %1073 = vmatprep.subr.bf16.mxu0 0
  %1074 = vmatpush1.bf16.msra.mxu0 0
  %1075 = vmatprep.subr.bf16.mxu0 0
  %1076 = vmatpush1.bf16.msra.mxu0 0
  %1077 = vmatprep.subr.bf16.mxu0 0
  %1078 = vmatpush1.bf16.msra.mxu0 0
  %1079 = vmatprep.subr.bf16.mxu0 0
  %1080 = vmatpush1.bf16.msra.mxu0 0
  %1081 = vmatprep.subr.bf16.mxu0 0
  %1082 = vmatpush1.bf16.msra.mxu0 0
  %1083 = vmatprep.subr.bf16.mxu0 0
  %1084 = vmatpush1.bf16.msra.mxu0 0
  %1085 = vmatprep.subr.bf16.mxu0 0
  %1086 = vmatpush1.bf16.msra.mxu0 0
  %1087 = vmatprep.subr.bf16.mxu0 0
  %1088 = vmatpush1.bf16.msra.mxu0 0
  %1089 = vmatprep.subr.bf16.mxu0 0
  %1090 = vmatpush1.bf16.msra.mxu0 0
  %1091 = vmatprep.subr.bf16.mxu0 0
  %1092 = vmatpush1.bf16.msra.mxu0 0
  %1093 = vmatprep.subr.bf16.mxu0 0
  %1094 = vmatpush1.bf16.msra.mxu0 0
  %1095 = vmatprep.subr.bf16.mxu0 0
  %1096 = vmatpush1.bf16.msra.mxu0 0
  %1097 = vmatprep.mubr.bf16.mxu0 0
  %1098 = vmatmul.mubr.bf16.gmra.mrb[0].mxu0 %v1063
  %v1099 = vpop.f32.mrb[0].mxu0
  %v1100 = vadd.f32 0.0, %v1099
  %v1101 = vpop.f32.mrb[0].mxu0
  %v1102 = vpop.f32.mrb[0].mxu0
  %v1103 = vpop.f32.mrb[0].mxu0
  %1104 = vdwg.mxu0
  %v1105 = vadd.f32 %v1057, %v1100
  %v1106 = vtanh.pop %v1105
  %v1107 = vadd.f32 %v1106, 1.0
  %v1108 = vmul.f32 %v1107, 0.5
  %v1109 = vmul.f32 %v1108, %v1045
  %1111 = vrot.lane.b32.xlu0 %v1106, 64
  %v1112 = vpop.permute.xlu0 %1111
  %v1114 = vmul.f32 %v1108, %v1112
  %1116 = vrot.lane.b32.xlu0 %v1114, 32
  %v1117 = vpop.permute.xlu0 %1116
  %v1119 = vadd.f32 %v1109, %v1117
  %v1120 = vtanh.pop %v1119
  %1122 = vrot.lane.b32.xlu0 %v1120, 64
  %v1123 = vpop.permute.xlu0 %1122
  %v1125 = vmul.f32 %v1108, %v1123
  %1127 = vrot.lane.b32.xlu0 %v1125, 32
  %v1128 = vpop.permute.xlu0 %1127
  %1130 = vst.msk [vmem:[#allocation3 + $0x58] sm:$0xff] %vm243, %v1128
  %v1131 = vld [vmem:[#allocation2 + $0x60] sm:$0xff]
  %v1132 = vpack.c.bf16 %v1125, %v1125
  %1134 = vrot.lane.b32.xlu0 %v1132, 32
  %v1135 = vpop.permute.xlu0 %1134
  %v1137 = vsel %vm243, %v1135, 0
  %1139 = vmatprep.subr.bf16.mxu0 0
  %1140 = vmatpush1.bf16.msra.mxu0 %v239
  %1141 = vmatprep.subr.bf16.mxu0 0
  %1142 = vmatpush1.bf16.msra.mxu0 %v240
  %1143 = vmatprep.subr.bf16.mxu0 0
  %1144 = vmatpush1.bf16.msra.mxu0 0
  %1145 = vmatprep.subr.bf16.mxu0 0
  %1146 = vmatpush1.bf16.msra.mxu0 0
  %1147 = vmatprep.subr.bf16.mxu0 0
  %1148 = vmatpush1.bf16.msra.mxu0 0
  %1149 = vmatprep.subr.bf16.mxu0 0
  %1150 = vmatpush1.bf16.msra.mxu0 0
  %1151 = vmatprep.subr.bf16.mxu0 0
  %1152 = vmatpush1.bf16.msra.mxu0 0
  %1153 = vmatprep.subr.bf16.mxu0 0
  %1154 = vmatpush1.bf16.msra.mxu0 0
  %1155 = vmatprep.subr.bf16.mxu0 0
  %1156 = vmatpush1.bf16.msra.mxu0 0
  %1157 = vmatprep.subr.bf16.mxu0 0
  %1158 = vmatpush1.bf16.msra.mxu0 0
  %1159 = vmatprep.subr.bf16.mxu0 0
  %1160 = vmatpush1.bf16.msra.mxu0 0
  %1161 = vmatprep.subr.bf16.mxu0 0
  %1162 = vmatpush1.bf16.msra.mxu0 0
  %1163 = vmatprep.subr.bf16.mxu0 0
  %1164 = vmatpush1.bf16.msra.mxu0 0
  %1165 = vmatprep.subr.bf16.mxu0 0
  %1166 = vmatpush1.bf16.msra.mxu0 0
  %1167 = vmatprep.subr.bf16.mxu0 0
  %1168 = vmatpush1.bf16.msra.mxu0 0
  %1169 = vmatprep.subr.bf16.mxu0 0
  %1170 = vmatpush1.bf16.msra.mxu0 0
  %1171 = vmatprep.mubr.bf16.mxu0 0
  %1172 = vmatmul.mubr.bf16.gmra.mrb[0].mxu0 %v1137
  %v1173 = vpop.f32.mrb[0].mxu0
  %v1174 = vadd.f32 0.0, %v1173
  %v1175 = vpop.f32.mrb[0].mxu0
  %v1176 = vpop.f32.mrb[0].mxu0
  %v1177 = vpop.f32.mrb[0].mxu0
  %1178 = vdwg.mxu0
  %v1179 = vadd.f32 %v1131, %v1174
  %v1180 = vtanh.pop %v1179
  %v1181 = vadd.f32 %v1180, 1.0
  %v1182 = vmul.f32 %v1181, 0.5
  %v1183 = vmul.f32 %v1182, %v1119
  %1185 = vrot.lane.b32.xlu0 %v1180, 64
  %v1186 = vpop.permute.xlu0 %1185
  %v1188 = vmul.f32 %v1182, %v1186
  %1190 = vrot.lane.b32.xlu0 %v1188, 32
  %v1191 = vpop.permute.xlu0 %1190
  %v1193 = vadd.f32 %v1183, %v1191
  %v1194 = vtanh.pop %v1193
  %1196 = vrot.lane.b32.xlu0 %v1194, 64
  %v1197 = vpop.permute.xlu0 %1196
  %v1199 = vmul.f32 %v1182, %v1197
  %1201 = vrot.lane.b32.xlu0 %v1199, 32
  %v1202 = vpop.permute.xlu0 %1201
  %1204 = vst.msk [vmem:[#allocation3 + $0x60] sm:$0xff] %vm243, %v1202
  %v1205 = vld [vmem:[#allocation2 + $0x68] sm:$0xff]
  %v1206 = vpack.c.bf16 %v1199, %v1199
  %1208 = vrot.lane.b32.xlu0 %v1206, 32
  %v1209 = vpop.permute.xlu0 %1208
  %v1211 = vsel %vm243, %v1209, 0
  %1213 = vmatprep.subr.bf16.mxu0 0
  %1214 = vmatpush1.bf16.msra.mxu0 %v239
  %1215 = vmatprep.subr.bf16.mxu0 0
  %1216 = vmatpush1.bf16.msra.mxu0 %v240
  %1217 = vmatprep.subr.bf16.mxu0 0
  %1218 = vmatpush1.bf16.msra.mxu0 0
  %1219 = vmatprep.subr.bf16.mxu0 0
  %1220 = vmatpush1.bf16.msra.mxu0 0
  %1221 = vmatprep.subr.bf16.mxu0 0
  %1222 = vmatpush1.bf16.msra.mxu0 0
  %1223 = vmatprep.subr.bf16.mxu0 0
  %1224 = vmatpush1.bf16.msra.mxu0 0
  %1225 = vmatprep.subr.bf16.mxu0 0
  %1226 = vmatpush1.bf16.msra.mxu0 0
  %1227 = vmatprep.subr.bf16.mxu0 0
  %1228 = vmatpush1.bf16.msra.mxu0 0
  %1229 = vmatprep.subr.bf16.mxu0 0
  %1230 = vmatpush1.bf16.msra.mxu0 0
  %1231 = vmatprep.subr.bf16.mxu0 0
  %1232 = vmatpush1.bf16.msra.mxu0 0
  %1233 = vmatprep.subr.bf16.mxu0 0
  %1234 = vmatpush1.bf16.msra.mxu0 0
  %1235 = vmatprep.subr.bf16.mxu0 0
  %1236 = vmatpush1.bf16.msra.mxu0 0
  %1237 = vmatprep.subr.bf16.mxu0 0
  %1238 = vmatpush1.bf16.msra.mxu0 0
  %1239 = vmatprep.subr.bf16.mxu0 0
  %1240 = vmatpush1.bf16.msra.mxu0 0
  %1241 = vmatprep.subr.bf16.mxu0 0
  %1242 = vmatpush1.bf16.msra.mxu0 0
  %1243 = vmatprep.subr.bf16.mxu0 0
  %1244 = vmatpush1.bf16.msra.mxu0 0
  %1245 = vmatprep.mubr.bf16.mxu0 0
  %1246 = vmatmul.mubr.bf16.gmra.mrb[0].mxu0 %v1211
  %v1247 = vpop.f32.mrb[0].mxu0
  %v1248 = vadd.f32 0.0, %v1247
  %v1249 = vpop.f32.mrb[0].mxu0
  %v1250 = vpop.f32.mrb[0].mxu0
  %v1251 = vpop.f32.mrb[0].mxu0
  %1252 = vdwg.mxu0
  %v1253 = vadd.f32 %v1205, %v1248
  %v1254 = vtanh.pop %v1253
  %v1255 = vadd.f32 %v1254, 1.0
  %v1256 = vmul.f32 %v1255, 0.5
  %v1257 = vmul.f32 %v1256, %v1193
  %1259 = vrot.lane.b32.xlu0 %v1254, 64
  %v1260 = vpop.permute.xlu0 %1259
  %v1262 = vmul.f32 %v1256, %v1260
  %1264 = vrot.lane.b32.xlu0 %v1262, 32
  %v1265 = vpop.permute.xlu0 %1264
  %v1267 = vadd.f32 %v1257, %v1265
  %v1268 = vtanh.pop %v1267
  %1270 = vrot.lane.b32.xlu0 %v1268, 64
  %v1271 = vpop.permute.xlu0 %1270
  %v1273 = vmul.f32 %v1256, %v1271
  %1275 = vrot.lane.b32.xlu0 %v1273, 32
  %v1276 = vpop.permute.xlu0 %1275
  %1278 = vst.msk [vmem:[#allocation3 + $0x68] sm:$0xff] %vm243, %v1276
  %v1279 = vld [vmem:[#allocation2 + $0x70] sm:$0xff]
  %v1280 = vpack.c.bf16 %v1273, %v1273
  %1282 = vrot.lane.b32.xlu0 %v1280, 32
  %v1283 = vpop.permute.xlu0 %1282
  %v1285 = vsel %vm243, %v1283, 0
  %1287 = vmatprep.subr.bf16.mxu0 0
  %1288 = vmatpush1.bf16.msra.mxu0 %v239
  %1289 = vmatprep.subr.bf16.mxu0 0
  %1290 = vmatpush1.bf16.msra.mxu0 %v240
  %1291 = vmatprep.subr.bf16.mxu0 0
  %1292 = vmatpush1.bf16.msra.mxu0 0
  %1293 = vmatprep.subr.bf16.mxu0 0
  %1294 = vmatpush1.bf16.msra.mxu0 0
  %1295 = vmatprep.subr.bf16.mxu0 0
  %1296 = vmatpush1.bf16.msra.mxu0 0
  %1297 = vmatprep.subr.bf16.mxu0 0
  %1298 = vmatpush1.bf16.msra.mxu0 0
  %1299 = vmatprep.subr.bf16.mxu0 0
  %1300 = vmatpush1.bf16.msra.mxu0 0
  %1301 = vmatprep.subr.bf16.mxu0 0
  %1302 = vmatpush1.bf16.msra.mxu0 0
  %1303 = vmatprep.subr.bf16.mxu0 0
  %1304 = vmatpush1.bf16.msra.mxu0 0
  %1305 = vmatprep.subr.bf16.mxu0 0
  %1306 = vmatpush1.bf16.msra.mxu0 0
  %1307 = vmatprep.subr.bf16.mxu0 0
  %1308 = vmatpush1.bf16.msra.mxu0 0
  %1309 = vmatprep.subr.bf16.mxu0 0
  %1310 = vmatpush1.bf16.msra.mxu0 0
  %1311 = vmatprep.subr.bf16.mxu0 0
  %1312 = vmatpush1.bf16.msra.mxu0 0
  %1313 = vmatprep.subr.bf16.mxu0 0
  %1314 = vmatpush1.bf16.msra.mxu0 0
  %1315 = vmatprep.subr.bf16.mxu0 0
  %1316 = vmatpush1.bf16.msra.mxu0 0
  %1317 = vmatprep.subr.bf16.mxu0 0
  %1318 = vmatpush1.bf16.msra.mxu0 0
  %1319 = vmatprep.mubr.bf16.mxu0 0
  %1320 = vmatmul.mubr.bf16.gmra.mrb[0].mxu0 %v1285
  %v1321 = vpop.f32.mrb[0].mxu0
  %v1322 = vadd.f32 0.0, %v1321
  %v1323 = vpop.f32.mrb[0].mxu0
  %v1324 = vpop.f32.mrb[0].mxu0
  %v1325 = vpop.f32.mrb[0].mxu0
  %1326 = vdwg.mxu0
  %v1327 = vadd.f32 %v1279, %v1322
  %v1328 = vtanh.pop %v1327
  %v1329 = vadd.f32 %v1328, 1.0
  %v1330 = vmul.f32 %v1329, 0.5
  %v1331 = vmul.f32 %v1330, %v1267
  %1333 = vrot.lane.b32.xlu0 %v1328, 64
  %v1334 = vpop.permute.xlu0 %1333
  %v1336 = vmul.f32 %v1330, %v1334
  %1338 = vrot.lane.b32.xlu0 %v1336, 32
  %v1339 = vpop.permute.xlu0 %1338
  %v1341 = vadd.f32 %v1331, %v1339
  %v1342 = vtanh.pop %v1341
  %1344 = vrot.lane.b32.xlu0 %v1342, 64
  %v1345 = vpop.permute.xlu0 %1344
  %v1347 = vmul.f32 %v1330, %v1345
  %1349 = vrot.lane.b32.xlu0 %v1347, 32
  %v1350 = vpop.permute.xlu0 %1349
  %1352 = vst.msk [vmem:[#allocation3 + $0x70] sm:$0xff] %vm243, %v1350
  %v1353 = vld [vmem:[#allocation2 + $0x78] sm:$0xff]
  %v1354 = vpack.c.bf16 %v1347, %v1347
  %1356 = vrot.lane.b32.xlu0 %v1354, 32
  %v1357 = vpop.permute.xlu0 %1356
  %v1359 = vsel %vm243, %v1357, 0
  %1361 = vmatprep.subr.bf16.mxu0 0
  %1362 = vmatpush1.bf16.msra.mxu0 %v239
  %1363 = vmatprep.subr.bf16.mxu0 0
  %1364 = vmatpush1.bf16.msra.mxu0 %v240
  %1365 = vmatprep.subr.bf16.mxu0 0
  %1366 = vmatpush1.bf16.msra.mxu0 0
  %1367 = vmatprep.subr.bf16.mxu0 0
  %1368 = vmatpush1.bf16.msra.mxu0 0
  %1369 = vmatprep.subr.bf16.mxu0 0
  %1370 = vmatpush1.bf16.msra.mxu0 0
  %1371 = vmatprep.subr.bf16.mxu0 0
  %1372 = vmatpush1.bf16.msra.mxu0 0
  %1373 = vmatprep.subr.bf16.mxu0 0
  %1374 = vmatpush1.bf16.msra.mxu0 0
  %1375 = vmatprep.subr.bf16.mxu0 0
  %1376 = vmatpush1.bf16.msra.mxu0 0
  %1377 = vmatprep.subr.bf16.mxu0 0
  %1378 = vmatpush1.bf16.msra.mxu0 0
  %1379 = vmatprep.subr.bf16.mxu0 0
  %1380 = vmatpush1.bf16.msra.mxu0 0
  %1381 = vmatprep.subr.bf16.mxu0 0
  %1382 = vmatpush1.bf16.msra.mxu0 0
  %1383 = vmatprep.subr.bf16.mxu0 0
  %1384 = vmatpush1.bf16.msra.mxu0 0
  %1385 = vmatprep.subr.bf16.mxu0 0
  %1386 = vmatpush1.bf16.msra.mxu0 0
  %1387 = vmatprep.subr.bf16.mxu0 0
  %1388 = vmatpush1.bf16.msra.mxu0 0
  %1389 = vmatprep.subr.bf16.mxu0 0
  %1390 = vmatpush1.bf16.msra.mxu0 0
  %1391 = vmatprep.subr.bf16.mxu0 0
  %1392 = vmatpush1.bf16.msra.mxu0 0
  %1393 = vmatprep.mubr.bf16.mxu0 0
  %1394 = vmatmul.mubr.bf16.gmra.mrb[0].mxu0 %v1359
  %v1395 = vpop.f32.mrb[0].mxu0
  %v1396 = vadd.f32 0.0, %v1395
  %v1397 = vpop.f32.mrb[0].mxu0
  %v1398 = vpop.f32.mrb[0].mxu0
  %v1399 = vpop.f32.mrb[0].mxu0
  %1400 = vdwg.mxu0
  %v1401 = vadd.f32 %v1353, %v1396
  %v1402 = vtanh.pop %v1401
  %v1403 = vadd.f32 %v1402, 1.0
  %v1404 = vmul.f32 %v1403, 0.5
  %v1405 = vmul.f32 %v1404, %v1341
  %1407 = vrot.lane.b32.xlu0 %v1402, 64
  %v1408 = vpop.permute.xlu0 %1407
  %v1410 = vmul.f32 %v1404, %v1408
  %1412 = vrot.lane.b32.xlu0 %v1410, 32
  %v1413 = vpop.permute.xlu0 %1412
  %v1415 = vadd.f32 %v1405, %v1413
  %v1416 = vtanh.pop %v1415
  %1418 = vrot.lane.b32.xlu0 %v1416, 64
  %v1419 = vpop.permute.xlu0 %1418
  %v1421 = vmul.f32 %v1404, %v1419
  %1423 = vrot.lane.b32.xlu0 %v1421, 32
  %v1424 = vpop.permute.xlu0 %1423
  %1426 = vst.msk [vmem:[#allocation3 + $0x78] sm:$0xff] %vm243, %v1424
  %1427 = vst.msk [vmem:[%s9] sm:$0xff] %vm243, %v1424
  %1429 = vrot.lane.b32.xlu0 %v1415, 96
  %v1430 = vpop.permute.xlu0 %1429
  %1432 = vst.msk [vmem:[%s10] sm:$0xff] %vm243, %v1430
  %v1433 = vld [vmem:[#allocation3] sm:$0xff]
  %v1434 = vld [vmem:[#allocation3 + $0x8] sm:$0xff]
  %v1435 = vld [vmem:[#allocation3 + $0x10] sm:$0xff]
  %v1436 = vld [vmem:[#allocation3 + $0x18] sm:$0xff]
  %v1437 = vld [vmem:[#allocation3 + $0x20] sm:$0xff]
  %v1438 = vld [vmem:[#allocation3 + $0x28] sm:$0xff]
  %v1439 = vld [vmem:[#allocation3 + $0x30] sm:$0xff]
  %v1440 = vld [vmem:[#allocation3 + $0x38] sm:$0xff]
  %v1441 = vld [vmem:[#allocation3 + $0x40] sm:$0xff]
  %v1442 = vld [vmem:[#allocation3 + $0x48] sm:$0xff]
  %v1443 = vld [vmem:[#allocation3 + $0x50] sm:$0xff]
  %v1444 = vld [vmem:[#allocation3 + $0x58] sm:$0xff]
  %v1445 = vld [vmem:[#allocation3 + $0x60] sm:$0xff]
  %v1446 = vld [vmem:[#allocation3 + $0x68] sm:$0xff]
  %v1447 = vld [vmem:[#allocation3 + $0x70] sm:$0xff]
  %v1448 = vld [vmem:[#allocation3 + $0x78] sm:$0xff]
  %v1449 = vpack.c.bf16 %v1434, %v1433
  %v1450 = vpack.c.bf16 %v1436, %v1435
  %v1451 = vpack.c.bf16 %v1438, %v1437
  %v1452 = vpack.c.bf16 %v1440, %v1439
  %v1453 = vpack.c.bf16 %v1442, %v1441
  %v1454 = vpack.c.bf16 %v1444, %v1443
  %v1455 = vpack.c.bf16 %v1446, %v1445
  %v1456 = vpack.c.bf16 %v1448, %v1447
  %v1457 = vld [vmem:[%s6] sm:$0xf]
  %v1458 = vld [vmem:[%s6 + $0x4] sm:$0xf]
  %v1459 = vld [vmem:[%s6 + $0x8] sm:$0xf]
  %v1460 = vld [vmem:[%s6 + $0xc] sm:$0xf]
  %v1461 = vld [vmem:[%s7] sm:$0x1]
  %v1463 = vlaneseq
  %v1464 = vshrl.u32 %v1463, 7
  %v1465 = vsub.s32 0, %v1464
  %v1466 = vrot.slane %v1461, %v1465
  %v1472 = vunpack.c.l.b16 %v1457
  %v1473 = vunpack.c.l.b16 %v1458
  %v1474 = vunpack.c.l.b16 %v1459
  %v1475 = vunpack.c.l.b16 %v1460
  %v1476 = vpack.c.b16 %v1473, %v1472
  %v1477 = vpack.c.b16 %v1475, %v1474
  %v1481 = vsel %vm243, %v1449, 0
  %v1484 = vsel %vm243, %v1450, 0
  %v1487 = vsel %vm243, %v1451, 0
  %v1490 = vsel %vm243, %v1452, 0
  %v1493 = vsel %vm243, %v1453, 0
  %v1496 = vsel %vm243, %v1454, 0
  %v1499 = vsel %vm243, %v1455, 0
  %v1502 = vsel %vm243, %v1456, 0
  %1504 = vmatprep.subr.bf16.mxu0 0
  %1505 = vmatpush1.bf16.msra.mxu0 %v1476
  %1506 = vmatprep.subr.bf16.mxu0 0
  %1507 = vmatpush1.bf16.msra.mxu0 %v1477
  %1508 = vmatprep.subr.bf16.mxu0 0
  %1509 = vmatpush1.bf16.msra.mxu0 0
  %1510 = vmatprep.subr.bf16.mxu0 0
  %1511 = vmatpush1.bf16.msra.mxu0 0
  %1512 = vmatprep.subr.bf16.mxu0 0
  %1513 = vmatpush1.bf16.msra.mxu0 0
  %1514 = vmatprep.subr.bf16.mxu0 0
  %1515 = vmatpush1.bf16.msra.mxu0 0
  %1516 = vmatprep.subr.bf16.mxu0 0
  %1517 = vmatpush1.bf16.msra.mxu0 0
  %1518 = vmatprep.subr.bf16.mxu0 0
  %1519 = vmatpush1.bf16.msra.mxu0 0
  %1520 = vmatprep.subr.bf16.mxu0 0
  %1521 = vmatpush1.bf16.msra.mxu0 0
  %1522 = vmatprep.subr.bf16.mxu0 0
  %1523 = vmatpush1.bf16.msra.mxu0 0
  %1524 = vmatprep.subr.bf16.mxu0 0
  %1525 = vmatpush1.bf16.msra.mxu0 0
  %1526 = vmatprep.subr.bf16.mxu0 0
  %1527 = vmatpush1.bf16.msra.mxu0 0
  %1528 = vmatprep.subr.bf16.mxu0 0
  %1529 = vmatpush1.bf16.msra.mxu0 0
  %1530 = vmatprep.subr.bf16.mxu0 0
  %1531 = vmatpush1.bf16.msra.mxu0 0
  %1532 = vmatprep.subr.bf16.mxu0 0
  %1533 = vmatpush1.bf16.msra.mxu0 0
  %1534 = vmatprep.subr.bf16.mxu0 0
  %1535 = vmatpush1.bf16.msra.mxu0 0
  %1536 = vmatprep.mubr.bf16.mxu0 0
  %1537 = vmatmul.mubr.bf16.gmra.mrb[0].mxu0 %v1481
  %v1538 = vpop.f32.mrb[0].mxu0
  %v1539 = vadd.f32 %v1466, %v1538
  %v1540 = vpop.f32.mrb[0].mxu0
  %v1541 = vpop.f32.mrb[0].mxu0
  %v1542 = vadd.f32 %v1466, %v1541
  %v1543 = vpop.f32.mrb[0].mxu0
  %1544 = vmatprep.mubr.bf16.mxu0 0
  %1545 = vmatmul.mubr.bf16.gmra.mrb[0].mxu0 %v1484
  %v1546 = vpop.f32.mrb[0].mxu0
  %v1547 = vadd.f32 %v1466, %v1546
  %v1548 = vpop.f32.mrb[0].mxu0
  %v1549 = vpop.f32.mrb[0].mxu0
  %v1550 = vadd.f32 %v1466, %v1549
  %v1551 = vpop.f32.mrb[0].mxu0
  %1552 = vmatprep.mubr.bf16.mxu0 0
  %1553 = vmatmul.mubr.bf16.gmra.mrb[0].mxu0 %v1487
  %v1554 = vpop.f32.mrb[0].mxu0
  %v1555 = vadd.f32 %v1466, %v1554
  %v1556 = vpop.f32.mrb[0].mxu0
  %v1557 = vpop.f32.mrb[0].mxu0
  %v1558 = vadd.f32 %v1466, %v1557
  %v1559 = vpop.f32.mrb[0].mxu0
  %1560 = vmatprep.mubr.bf16.mxu0 0
  %1561 = vmatmul.mubr.bf16.gmra.mrb[0].mxu0 %v1490
  %v1562 = vpop.f32.mrb[0].mxu0
  %v1563 = vadd.f32 %v1466, %v1562
  %v1564 = vpop.f32.mrb[0].mxu0
  %v1565 = vpop.f32.mrb[0].mxu0
  %v1566 = vadd.f32 %v1466, %v1565
  %v1567 = vpop.f32.mrb[0].mxu0
  %1568 = vmatprep.mubr.bf16.mxu0 0
  %1569 = vmatmul.mubr.bf16.gmra.mrb[0].mxu0 %v1493
  %v1570 = vpop.f32.mrb[0].mxu0
  %v1571 = vadd.f32 %v1466, %v1570
  %v1572 = vpop.f32.mrb[0].mxu0
  %v1573 = vpop.f32.mrb[0].mxu0
  %v1574 = vadd.f32 %v1466, %v1573
  %v1575 = vpop.f32.mrb[0].mxu0
  %1576 = vmatprep.mubr.bf16.mxu0 0
  %1577 = vmatmul.mubr.bf16.gmra.mrb[0].mxu0 %v1496
  %v1578 = vpop.f32.mrb[0].mxu0
  %v1579 = vadd.f32 %v1466, %v1578
  %v1580 = vpop.f32.mrb[0].mxu0
  %v1581 = vpop.f32.mrb[0].mxu0
  %v1582 = vadd.f32 %v1466, %v1581
  %v1583 = vpop.f32.mrb[0].mxu0
  %1584 = vmatprep.mubr.bf16.mxu0 0
  %1585 = vmatmul.mubr.bf16.gmra.mrb[0].mxu0 %v1499
  %v1586 = vpop.f32.mrb[0].mxu0
  %v1587 = vadd.f32 %v1466, %v1586
  %v1588 = vpop.f32.mrb[0].mxu0
  %v1589 = vpop.f32.mrb[0].mxu0
  %v1590 = vadd.f32 %v1466, %v1589
  %v1591 = vpop.f32.mrb[0].mxu0
  %1592 = vmatprep.mubr.bf16.mxu0 0
  %1593 = vmatmul.mubr.bf16.gmra.mrb[0].mxu0 %v1502
  %v1594 = vpop.f32.mrb[0].mxu0
  %v1595 = vadd.f32 %v1466, %v1594
  %v1596 = vpop.f32.mrb[0].mxu0
  %v1597 = vpop.f32.mrb[0].mxu0
  %v1598 = vadd.f32 %v1466, %v1597
  %v1599 = vpop.f32.mrb[0].mxu0
  %1600 = vdwg.mxu0
  %1601 = vst [vmem:[%s8] sm:$0xff] %v1539
  %1602 = vst [vmem:[%s8 + $0x8] sm:$0xff] %v1542
  %1603 = vst [vmem:[%s8 + $0x10] sm:$0xff] %v1547
  %1604 = vst [vmem:[%s8 + $0x18] sm:$0xff] %v1550
  %1605 = vst [vmem:[%s8 + $0x20] sm:$0xff] %v1555
  %1606 = vst [vmem:[%s8 + $0x28] sm:$0xff] %v1558
  %1607 = vst [vmem:[%s8 + $0x30] sm:$0xff] %v1563
  %1608 = vst [vmem:[%s8 + $0x38] sm:$0xff] %v1566
  %1609 = vst [vmem:[%s8 + $0x40] sm:$0xff] %v1571
  %1610 = vst [vmem:[%s8 + $0x48] sm:$0xff] %v1574
  %1611 = vst [vmem:[%s8 + $0x50] sm:$0xff] %v1579
  %1612 = vst [vmem:[%s8 + $0x58] sm:$0xff] %v1582
  %1613 = vst [vmem:[%s8 + $0x60] sm:$0xff] %v1587
  %1614 = vst [vmem:[%s8 + $0x68] sm:$0xff] %v1590
  %1615 = vst [vmem:[%s8 + $0x70] sm:$0xff] %v1595
  %1616 = vst [vmem:[%s8 + $0x78] sm:$0xff] %v1598
  // Predicated region
  $region34: #{lstm_model_forward.1} parent=0 // pred_check
    _
  $region35: #{lstm_model_forward.1} parent=0 // pred_check_branch
    %1618 = sbr.rel (0) target = $region37
  $region36: #{lstm_model_forward.1} parent=0 // pred_region
    _
  $region37: #{lstm_model_forward.1} parent=0 // pred_fallthru
    _
  // Predicated region
  $region38: #{lstm_model_forward.1} parent=0 // pred_check
    _
  $region39: #{lstm_model_forward.1} parent=0 // pred_check_branch
    %1620 = sbr.rel (0) target = $region41
  $region40: #{lstm_model_forward.1} parent=0 // pred_region
    _
  $region41: #{lstm_model_forward.1} parent=0 // pred_fallthru
    _
  // Predicated region
  $region42: #{lstm_model_forward.1} parent=0 // pred_check
    _
  $region43: #{lstm_model_forward.1} parent=0 // pred_check_branch
    %1622 = sbr.rel (0) target = $region45
  $region44: #{lstm_model_forward.1} parent=0 // pred_region
    _
  $region45: #{lstm_model_forward.1} parent=0 // pred_fallthru
    _
  // Predicated region
  $region46: #{lstm_model_forward.1} parent=0 // pred_check
    _
  $region47: #{lstm_model_forward.1} parent=0 // pred_check_branch
    %1624 = sbr.rel (0) target = $region49
  $region48: #{lstm_model_forward.1} parent=0 // pred_region
    _
  $region49: #{lstm_model_forward.1} parent=0 // pred_fallthru
    _
  // Predicated region
  $region50: #{lstm_model_forward.1} parent=0 // pred_check
    _
  $region51: #{lstm_model_forward.1} parent=0 // pred_check_branch
    %1626 = sbr.rel (0) target = $region53
  $region52: #{lstm_model_forward.1} parent=0 // pred_region
    _
  $region53: #{lstm_model_forward.1} parent=0 // pred_fallthru
    _
  // Predicated region
  $region54: #{lstm_model_forward.1} parent=0 // pred_check
    _
  $region55: #{lstm_model_forward.1} parent=0 // pred_check_branch
    %1628 = sbr.rel (0) target = $region57
  $region56: #{lstm_model_forward.1} parent=0 // pred_region
    _
  $region57: #{lstm_model_forward.1} parent=0 // pred_fallthru
    _

</llo_original>
